<compile_context>
chip_gen: v5e
topology: v5e:2x2
jax: 0.10.0
libtpu: 0.0.40
codegen_flags: <defaults>
</compile_context>

<pallas_src>
import jax
import jax.numpy as jnp
from jax.experimental import pallas as pl
from jax.experimental.pallas import tpu as pltpu

LANES = 128
D_IN, H1, H2, D_OUT = 2, 20, 40, 2
IN_ROWS = 8                       # x / y slabs carry 8 sublane rows (2 real)
TILE_CAP = 2048                   # max batch-lanes per grid step

# Lane offsets of the three parameter blocks inside the packed (128, 384) slab.
L1_OFF = 0                        # lanes   0..127: lane0=w1[0,:], lane1=w1[1,:], lane2=b1(+carrier)
W2_OFF = LANES                    # lanes 128..255: w2^T, b2 column, carrier
W3_OFF = 2 * LANES                # lanes 256..383: w3^T, b3 column
PARAM_LANES = 3 * LANES           # 128 x 384 x 4 B = 192 KiB -> one DMA, VMEM-resident


def mlp_kernel(x_ref, p_ref, o_ref):
    x = x_ref[...]                                        # (8, T): rows 0..1 = input features
    # ---- Layer 1: Linear(2 -> 20) + ReLU on the VPU (contraction dim is only 2) ----
    # lane 2 of the L1 block holds b1 with an extra 1.0 at sublane H1, so that
    # h1[H1, :] == 1 after ReLU (bias carrier consumed by the layer-2 matmul).
    h1 = (p_ref[:, L1_OFF + 0:L1_OFF + 1] * x[0:1, :]
          + p_ref[:, L1_OFF + 1:L1_OFF + 2] * x[1:2, :]
          + p_ref[:, L1_OFF + 2:L1_OFF + 3])
    h1 = jnp.maximum(h1, 0.0)                             # (128, T); rows > H1 stay exactly 0
    # ---- Layer 2: Linear(20 -> 40) + ReLU on the MXU (bias folded in) ----
    w2a = p_ref[:, W2_OFF:W2_OFF + LANES]                 # (128, 128)
    h2 = jnp.dot(w2a, h1, preferred_element_type=jnp.float32,
                 precision=jax.lax.Precision.HIGHEST)     # (128, T); row H2 == 1 (carrier)
    h2 = jnp.maximum(h2, 0.0)
    # ---- Layer 3: Linear(40 -> 2) on the MXU (bias folded in, no activation) ----
    w3a = p_ref[:, W3_OFF:W3_OFF + LANES]                 # (128, 128)
    out = jnp.dot(w3a, h2, preferred_element_type=jnp.float32,
                  precision=jax.lax.Precision.HIGHEST)    # (128, T); rows 0..1 valid
    o_ref[...] = out[0:IN_ROWS, :].astype(o_ref.dtype)    # (8, T) lane-dense, unmasked store


def pack_params(w1, b1, w2, b2, w3, b3):
    """Pack all weights/biases into one zero-padded (128, 384) f32 slab.

    Weights are stored transposed (out-features on sublanes) because the
    kernel computes  h_out = W^T_padded @ h_in  with batch on the lane axis.
    Biases ride as an extra matmul column driven by a constant-1 carrier row.
    """
    p = jnp.zeros((LANES, PARAM_LANES), jnp.float32)
    # Layer-1 block (used on the VPU).
    p = p.at[:H1, L1_OFF + 0].set(w1[0].astype(jnp.float32))
    p = p.at[:H1, L1_OFF + 1].set(w1[1].astype(jnp.float32))
    p = p.at[:H1, L1_OFF + 2].set(b1.astype(jnp.float32))
    p = p.at[H1, L1_OFF + 2].set(1.0)                 # h1 carrier row (== 1 after ReLU)
    # Layer-2 block: W2A[j, i] = w2[i, j]; column H1 = b2; carrier for layer 3.
    p = p.at[:H2, W2_OFF:W2_OFF + H1].set(w2.T.astype(jnp.float32))
    p = p.at[:H2, W2_OFF + H1].set(b2.astype(jnp.float32))
    p = p.at[H2, W2_OFF + H1].set(1.0)                # h2 carrier row (== 1 after ReLU)
    # Layer-3 block: W3A[j, i] = w3[i, j]; column H2 = b3.
    p = p.at[:D_OUT, W3_OFF:W3_OFF + H2].set(w3.T.astype(jnp.float32))
    p = p.at[:D_OUT, W3_OFF + H2].set(b3.astype(jnp.float32))
    return p


def _round_up(n, m):
    return -(-n // m) * m


def mlp_forward(x, w1, b1, w2, b2, w3, b3, *, tile_m=None):
    """y = relu(relu(x @ w1 + b1) @ w2 + b2) @ w3 + b3, weights stored (in, out)."""
    batch = x.shape[0]
    if tile_m is None:
        # ~half the batch per tile (>= 2 grid steps so v7x's two TensorCores both
        # get work), rounded to a lane multiple, capped so per-step VMEM stays small.
        tile_m = max(LANES, min(TILE_CAP, _round_up(-(-batch // 2), LANES)))
    n_tiles = -(-batch // tile_m)
    batch_p = n_tiles * tile_m

    # Transposed, batch-on-lanes layout: (8, batch_p), features on rows 0..1.
    xp = jnp.zeros((IN_ROWS, batch_p), jnp.float32).at[:D_IN, :batch].set(
        x.astype(jnp.float32).T)
    params = pack_params(w1, b1, w2, b2, w3, b3)

    # Advisory cost: two padded 128x128xT matmuls + the tiny VPU layer per tile.
    flops = 2 * batch_p * (2 * LANES * LANES + 3 * LANES)
    bytes_accessed = (xp.size + params.size + IN_ROWS * batch_p) * 4

    out_padded = pl.pallas_call(
        mlp_kernel,
        out_shape=jax.ShapeDtypeStruct((IN_ROWS, batch_p), jnp.float32),
        grid=(n_tiles,),
        in_specs=[
            pl.BlockSpec((IN_ROWS, tile_m), lambda i: (0, i)),        # x batch tile
            pl.BlockSpec((LANES, PARAM_LANES), lambda i: (0, 0)),     # params, resident
        ],
        out_specs=pl.BlockSpec((IN_ROWS, tile_m), lambda i: (0, i)),
        compiler_params=pltpu.CompilerParams(
            dimension_semantics=("parallel",)),                       # shard tiles across TCs
        cost_estimate=pl.CostEstimate(
            flops=flops, transcendentals=0, bytes_accessed=bytes_accessed),
    )(xp, params)
    return out_padded[:D_OUT, :batch].T


def init_linear(key, in_features, out_features):
    # Deterministic init mimicking torch.nn.Linear: U(-1/sqrt(in), 1/sqrt(in)).
    kw, kb = jax.random.split(key)
    bound = 1.0 / jnp.sqrt(jnp.float32(in_features))
    # Stored as (in_features, out_features) so forward is x @ W + b.
    w = jax.random.uniform(kw, (in_features, out_features), jnp.float32, -bound, bound)
    b = jax.random.uniform(kb, (out_features,), jnp.float32, -bound, bound)
    return w, b


def reference_forward(x, w1, b1, w2, b2, w3, b3):
    hp = jax.lax.Precision.HIGHEST
    h1 = jnp.maximum(jnp.dot(x, w1, precision=hp) + b1, 0.0)
    h2 = jnp.maximum(jnp.dot(h1, w2, precision=hp) + b2, 0.0)
    return jnp.dot(h2, w3, precision=hp) + b3


if __name__ == "__main__":
    key = jax.random.PRNGKey(0)
    kx, k1, k2, k3 = jax.random.split(key, 4)

    w1, b1 = init_linear(k1, D_IN, H1)
    w2, b2 = init_linear(k2, H1, H2)
    w3, b3 = init_linear(k3, H2, D_OUT)

    # batch=8: single-tile path; batch=300: 2 "parallel" grid steps + batch padding.
    for batch in (8, 300):
        x = jax.random.normal(jax.random.fold_in(kx, batch), (batch, D_IN), jnp.float32)
        out = jax.block_until_ready(mlp_forward(x, w1, b1, w2, b2, w3, b3))
        ref = reference_forward(x, w1, b1, w2, b2, w3, b3)
        assert out.shape == (batch, D_OUT)
        assert jnp.allclose(out, ref, atol=1e-4, rtol=1e-4), (
            batch, float(jnp.max(jnp.abs(out - ref))))

    print("KERNEL_OK")
</pallas_src>

<mosaic_0001>
module attributes {stable_mosaic.version = 11 : i64} {
  func.func @mlp_kernel(%arg0: i32, %arg1: memref<8x128xf32, #tpu.memory_space<vmem>>, %arg2: memref<128x384xf32, #tpu.memory_space<vmem>>, %arg3: memref<8x128xf32, #tpu.memory_space<vmem>>) attributes {dimension_semantics = [#tpu.dimension_semantics<parallel>], iteration_bounds = array<i64: 1>, scalar_prefetch = 0 : i64, scratch_operands = 0 : i64, tpu.core_type = #tpu.core_type<tc>, window_params = [{transform_indices = @transform_0, window_bounds = array<i64: 8, 128>}, {pipeline_mode = #tpu.pipeline_mode<synchronous>, transform_indices = @transform_1, window_bounds = array<i64: 128, 384>}, {transform_indices = @transform_2, window_bounds = array<i64: 8, 128>}]} {
    %c0 = arith.constant 0 : index
    %c0_0 = arith.constant 0 : index
    %0 = vector.load %arg1[%c0, %c0_0] : memref<8x128xf32, #tpu.memory_space<vmem>>, vector<8x128xf32>
    %c0_1 = arith.constant 0 : index
    %c0_2 = arith.constant 0 : index
    %1 = vector.load %arg2[%c0_1, %c0_2] : memref<128x384xf32, #tpu.memory_space<vmem>>, vector<128x1xf32>
    %2 = vector.extract_strided_slice %0 {offsets = [0, 0], sizes = [1, 128], strides = [1, 1]} : vector<8x128xf32> to vector<1x128xf32>
    %3 = vector.broadcast %1 : vector<128x1xf32> to vector<128x128xf32>
    %4 = vector.broadcast %2 : vector<1x128xf32> to vector<128x128xf32>
    %5 = arith.mulf %3, %4 : vector<128x128xf32>
    %c0_3 = arith.constant 0 : index
    %c1 = arith.constant 1 : index
    %6 = vector.load %arg2[%c0_3, %c1] : memref<128x384xf32, #tpu.memory_space<vmem>>, vector<128x1xf32>
    %7 = vector.extract_strided_slice %0 {offsets = [1, 0], sizes = [1, 128], strides = [1, 1]} : vector<8x128xf32> to vector<1x128xf32>
    %8 = vector.broadcast %6 : vector<128x1xf32> to vector<128x128xf32>
    %9 = vector.broadcast %7 : vector<1x128xf32> to vector<128x128xf32>
    %10 = arith.mulf %8, %9 : vector<128x128xf32>
    %11 = arith.addf %5, %10 : vector<128x128xf32>
    %c0_4 = arith.constant 0 : index
    %c2 = arith.constant 2 : index
    %12 = vector.load %arg2[%c0_4, %c2] : memref<128x384xf32, #tpu.memory_space<vmem>>, vector<128x1xf32>
    %13 = vector.broadcast %12 : vector<128x1xf32> to vector<128x128xf32>
    %14 = arith.addf %11, %13 : vector<128x128xf32>
    %cst = arith.constant 0.000000e+00 : f32
    %15 = vector.broadcast %cst : f32 to vector<128x128xf32>
    %16 = arith.maximumf %14, %15 : vector<128x128xf32>
    %c0_5 = arith.constant 0 : index
    %c128 = arith.constant 128 : index
    %17 = vector.load %arg2[%c0_5, %c128] : memref<128x384xf32, #tpu.memory_space<vmem>>, vector<128x128xf32>
    %cst_6 = arith.constant dense<0.000000e+00> : vector<128x128xf32>
    %18 = tpu.matmul %17, %16, %cst_6 {dimension_numbers = #tpu.dot_dimension_numbers<[1], [0], [0], [1], [0, 0, 1, 1], [], []>, precision = #tpu.contract_precision<fp32>} : vector<128x128xf32>, vector<128x128xf32>, vector<128x128xf32> -> vector<128x128xf32>
    %cst_7 = arith.constant 0.000000e+00 : f32
    %19 = vector.broadcast %cst_7 : f32 to vector<128x128xf32>
    %20 = arith.maximumf %18, %19 : vector<128x128xf32>
    %c0_8 = arith.constant 0 : index
    %c256 = arith.constant 256 : index
    %21 = vector.load %arg2[%c0_8, %c256] : memref<128x384xf32, #tpu.memory_space<vmem>>, vector<128x128xf32>
    %cst_9 = arith.constant dense<0.000000e+00> : vector<128x128xf32>
    %22 = tpu.matmul %21, %20, %cst_9 {dimension_numbers = #tpu.dot_dimension_numbers<[1], [0], [0], [1], [0, 0, 1, 1], [], []>, precision = #tpu.contract_precision<fp32>} : vector<128x128xf32>, vector<128x128xf32>, vector<128x128xf32> -> vector<128x128xf32>
    %23 = vector.extract_strided_slice %22 {offsets = [0, 0], sizes = [8, 128], strides = [1, 1]} : vector<128x128xf32> to vector<8x128xf32>
    %c0_10 = arith.constant 0 : index
    %c0_11 = arith.constant 0 : index
    %24 = vector.load %arg3[%c0_10, %c0_11] : memref<8x128xf32, #tpu.memory_space<vmem>>, vector<8x128xf32>
    tpu.vector_store %arg3[%c0_10, %c0_11], %23 {strides = array<i32>} : memref<8x128xf32, #tpu.memory_space<vmem>>, vector<8x128xf32>,
    return
  }
  func.func @transform_0(%arg0: i32) -> (i32, i32) {
    %c0_i32 = arith.constant 0 : i32
    %c0_i32_0 = arith.constant 0 : i32
    return %c0_i32, %arg0 : i32, i32
  }
  func.func @transform_1(%arg0: i32) -> (i32, i32) {
    %c0_i32 = arith.constant 0 : i32
    %c0_i32_0 = arith.constant 0 : i32
    %c0_i32_1 = arith.constant 0 : i32
    return %c0_i32, %c0_i32_0 : i32, i32
  }
  func.func @transform_2(%arg0: i32) -> (i32, i32) {
    %c0_i32 = arith.constant 0 : i32
    %c0_i32_0 = arith.constant 0 : i32
    return %c0_i32, %arg0 : i32, i32
  }
}

</mosaic_0001>

<llo_original>
// kernel: tpu_custom_call.1
$region0: #{tpu_custom_call.1}
  #allocation0 [shape = 'u32[]', space=smem, size = 0x4, offset = 0x4, fixed_abs, tag = 'smem constant byte address 0x4 - core index']
  #allocation1 [shape = 'u32[72,128]{1,0:T(1,128)}', space=vmem, size = 0x9000, scoped, tag = 'internal scratch']
  %s0 = inlined_call_operand.hbm [shape: f32[8,128], index: 0, kind: input, shape index: {}]
  %s1 = inlined_call_operand.hbm [shape: f32[128,384], index: 1, kind: input, shape index: {}]
  %s2 = inlined_call_operand.hbm [shape: f32[8,128], index: 2, kind: output, shape index: {}]
  %s3 = sld [smem:[#allocation0]]
  $region26: #{tpu_custom_call.1} parent=0
    _
  %s5 = ssub.s32 1, %s3
  %s6 = scalar_select 0, %s5, %s3
  $region1: #{tpu_custom_call.1} parent=0
    #allocation2 [shape = 'u8[4096]{0}', space=vmem, size = 0x1000, scoped, tag = 'input window, operand 0, single buffered']
    #allocation3 [shape = 's32[1]{0}', space=sflag, size = 0x4, scoped, tag = 'scoped memory for tpu_custom_call.1']
    #allocation4 [shape = 's32[1]{0}', space=sflag, size = 0x4, scoped, tag = 'scoped memory for tpu_custom_call.1']
    #allocation5 [shape = 'u8[196608]{0}', space=vmem, size = 0x30000, scoped, tag = 'input window, operand 1, single buffered']
    #allocation6 [shape = 's32[1]{0}', space=sflag, size = 0x4, scoped, tag = 'scoped memory for tpu_custom_call.1']
    #allocation7 [shape = 'u8[4096]{0}', space=vmem, size = 0x1000, scoped, tag = 'output window, operand 0, single buffered']
    %7 = vsyncpa [#allocation3], 0
    %8 = vsyncpa [#allocation6], 0
    %9 = vsyncpa [#allocation4], 0
    // Predicated region
    $region2: #{tpu_custom_call.1} parent=1 // pred_check
      _
    $region3: #{tpu_custom_call.1} parent=1 // pred_check_branch
      %11 = sbr.rel (0) target = $region5
    $region4: #{tpu_custom_call.1} parent=1 // pred_region
      %13 = vsyncadd [#allocation3], 0
      %s15 = sshll.u32 %s0, 4
      %s16 = int_to_ptr.hbm [resolvable:$true] %s15
      %s17 = sshll.u32 [#allocation2], 4
      %s18 = int_to_ptr.vmem [resolvable:$true] %s17
      %20 = dma.hbm_to_vmem [thread:$0]  %s16, 128, %s18, [#allocation3]
    $region5: #{tpu_custom_call.1} parent=1 // pred_fallthru
      _
    // Predicated region
    $region6: #{tpu_custom_call.1} parent=1 // pred_check
      _
    $region7: #{tpu_custom_call.1} parent=1 // pred_check_branch
      %22 = sbr.rel (0) target = $region9
    $region8: #{tpu_custom_call.1} parent=1 // pred_region
      %24 = vsyncadd [#allocation6], 0
      %s25 = sshll.u32 %s1, 4
      %s26 = int_to_ptr.hbm [resolvable:$true] %s25
      %s27 = sshll.u32 [#allocation5], 4
      %s28 = int_to_ptr.vmem [resolvable:$true] %s27
      %33 = dma.hbm_to_vmem [thread:$0]  %s26, 6144, %s28, [#allocation6], 384, 384, 24
    $region9: #{tpu_custom_call.1} parent=1 // pred_fallthru
      _
    // Predicated region
    $region10: #{tpu_custom_call.1} parent=1 // pred_check
      _
    $region11: #{tpu_custom_call.1} parent=1 // pred_check_branch
      %35 = sbr.rel (0) target = $region13
    $region12: #{tpu_custom_call.1} parent=1 // pred_region
      %37 = dma.done [#allocation3], 128
    $region13: #{tpu_custom_call.1} parent=1 // pred_fallthru
      _
    // Predicated region
    $region14: #{tpu_custom_call.1} parent=1 // pred_check
      _
    $region15: #{tpu_custom_call.1} parent=1 // pred_check_branch
      %39 = sbr.rel (0) target = $region17
    $region16: #{tpu_custom_call.1} parent=1 // pred_region
      %41 = dma.done [#allocation6], 6144
    $region17: #{tpu_custom_call.1} parent=1 // pred_fallthru
      _
    %v42 = vld [vmem:[#allocation2] sm:$0xff]
    %v43 = vld [vmem:[#allocation5] sm:$0xff]
    %v44 = vld [vmem:[#allocation5 + $0x18] sm:$0xff]
    %v45 = vld [vmem:[#allocation5 + $0x30] sm:$0xff]
    %v46 = vld [vmem:[#allocation5 + $0x48] sm:$0xff]
    %v47 = vld [vmem:[#allocation5 + $0x60] sm:$0xff]
    %v48 = vld [vmem:[#allocation5 + $0x78] sm:$0xff]
    %v49 = vld [vmem:[#allocation5 + $0x90] sm:$0xff]
    %v50 = vld [vmem:[#allocation5 + $0xa8] sm:$0xff]
    %v51 = vld [vmem:[#allocation5 + $0xc0] sm:$0xff]
    %v52 = vld [vmem:[#allocation5 + $0xd8] sm:$0xff]
    %v53 = vld [vmem:[#allocation5 + $0xf0] sm:$0xff]
    %v54 = vld [vmem:[#allocation5 + $0x108] sm:$0xff]
    %v55 = vld [vmem:[#allocation5 + $0x120] sm:$0xff]
    %v56 = vld [vmem:[#allocation5 + $0x138] sm:$0xff]
    %v57 = vld [vmem:[#allocation5 + $0x150] sm:$0xff]
    %v58 = vld [vmem:[#allocation5 + $0x168] sm:$0xff]
    %60 = vset.pattern.permute.xlu0 0
    %61 = vperm.xlu0 %60, %v43
    %v62 = vpop.permute.xlu0 %61
    %65 = vset.pattern.permute.xlu0 0
    %66 = vperm.xlu0 %65, %v44
    %v67 = vpop.permute.xlu0 %66
    %70 = vset.pattern.permute.xlu0 0
    %71 = vperm.xlu0 %70, %v45
    %v72 = vpop.permute.xlu0 %71
    %75 = vset.pattern.permute.xlu0 0
    %76 = vperm.xlu0 %75, %v46
    %v77 = vpop.permute.xlu0 %76
    %80 = vset.pattern.permute.xlu0 0
    %81 = vperm.xlu0 %80, %v47
    %v82 = vpop.permute.xlu0 %81
    %85 = vset.pattern.permute.xlu0 0
    %86 = vperm.xlu0 %85, %v48
    %v87 = vpop.permute.xlu0 %86
    %90 = vset.pattern.permute.xlu0 0
    %91 = vperm.xlu0 %90, %v49
    %v92 = vpop.permute.xlu0 %91
    %95 = vset.pattern.permute.xlu0 0
    %96 = vperm.xlu0 %95, %v50
    %v97 = vpop.permute.xlu0 %96
    %100 = vset.pattern.permute.xlu0 0
    %101 = vperm.xlu0 %100, %v51
    %v102 = vpop.permute.xlu0 %101
    %105 = vset.pattern.permute.xlu0 0
    %106 = vperm.xlu0 %105, %v52
    %v107 = vpop.permute.xlu0 %106
    %110 = vset.pattern.permute.xlu0 0
    %111 = vperm.xlu0 %110, %v53
    %v112 = vpop.permute.xlu0 %111
    %115 = vset.pattern.permute.xlu0 0
    %116 = vperm.xlu0 %115, %v54
    %v117 = vpop.permute.xlu0 %116
    %120 = vset.pattern.permute.xlu0 0
    %121 = vperm.xlu0 %120, %v55
    %v122 = vpop.permute.xlu0 %121
    %125 = vset.pattern.permute.xlu0 0
    %126 = vperm.xlu0 %125, %v56
    %v127 = vpop.permute.xlu0 %126
    %130 = vset.pattern.permute.xlu0 0
    %131 = vperm.xlu0 %130, %v57
    %v132 = vpop.permute.xlu0 %131
    %135 = vset.pattern.permute.xlu0 0
    %136 = vperm.xlu0 %135, %v58
    %v137 = vpop.permute.xlu0 %136
    %v139 = vperm.slane %v42, 0
    %v140 = vmul.f32 %v62, %v139
    %v141 = vmul.f32 %v67, %v139
    %v142 = vmul.f32 %v72, %v139
    %v143 = vmul.f32 %v77, %v139
    %v144 = vmul.f32 %v82, %v139
    %v145 = vmul.f32 %v87, %v139
    %v146 = vmul.f32 %v92, %v139
    %v147 = vmul.f32 %v97, %v139
    %v148 = vmul.f32 %v102, %v139
    %v149 = vmul.f32 %v107, %v139
    %v150 = vmul.f32 %v112, %v139
    %v151 = vmul.f32 %v117, %v139
    %v152 = vmul.f32 %v122, %v139
    %v153 = vmul.f32 %v127, %v139
    %v154 = vmul.f32 %v132, %v139
    %v155 = vmul.f32 %v137, %v139
    %156 = vset.pattern.permute.xlu0 1
    %157 = vperm.xlu0 %156, %v43
    %v158 = vpop.permute.xlu0 %157
    %160 = vset.pattern.permute.xlu0 1
    %161 = vperm.xlu0 %160, %v44
    %v162 = vpop.permute.xlu0 %161
    %164 = vset.pattern.permute.xlu0 1
    %165 = vperm.xlu0 %164, %v45
    %v166 = vpop.permute.xlu0 %165
    %168 = vset.pattern.permute.xlu0 1
    %169 = vperm.xlu0 %168, %v46
    %v170 = vpop.permute.xlu0 %169
    %172 = vset.pattern.permute.xlu0 1
    %173 = vperm.xlu0 %172, %v47
    %v174 = vpop.permute.xlu0 %173
    %176 = vset.pattern.permute.xlu0 1
    %177 = vperm.xlu0 %176, %v48
    %v178 = vpop.permute.xlu0 %177
    %180 = vset.pattern.permute.xlu0 1
    %181 = vperm.xlu0 %180, %v49
    %v182 = vpop.permute.xlu0 %181
    %184 = vset.pattern.permute.xlu0 1
    %185 = vperm.xlu0 %184, %v50
    %v186 = vpop.permute.xlu0 %185
    %188 = vset.pattern.permute.xlu0 1
    %189 = vperm.xlu0 %188, %v51
    %v190 = vpop.permute.xlu0 %189
    %192 = vset.pattern.permute.xlu0 1
    %193 = vperm.xlu0 %192, %v52
    %v194 = vpop.permute.xlu0 %193
    %196 = vset.pattern.permute.xlu0 1
    %197 = vperm.xlu0 %196, %v53
    %v198 = vpop.permute.xlu0 %197
    %200 = vset.pattern.permute.xlu0 1
    %201 = vperm.xlu0 %200, %v54
    %v202 = vpop.permute.xlu0 %201
    %204 = vset.pattern.permute.xlu0 1
    %205 = vperm.xlu0 %204, %v55
    %v206 = vpop.permute.xlu0 %205
    %208 = vset.pattern.permute.xlu0 1
    %209 = vperm.xlu0 %208, %v56
    %v210 = vpop.permute.xlu0 %209
    %212 = vset.pattern.permute.xlu0 1
    %213 = vperm.xlu0 %212, %v57
    %v214 = vpop.permute.xlu0 %213
    %216 = vset.pattern.permute.xlu0 1
    %217 = vperm.xlu0 %216, %v58
    %v218 = vpop.permute.xlu0 %217
    %v220 = vperm.slane %v42, 1
    %v221 = vmul.f32 %v158, %v220
    %v222 = vmul.f32 %v162, %v220
    %v223 = vmul.f32 %v166, %v220
    %v224 = vmul.f32 %v170, %v220
    %v225 = vmul.f32 %v174, %v220
    %v226 = vmul.f32 %v178, %v220
    %v227 = vmul.f32 %v182, %v220
    %v228 = vmul.f32 %v186, %v220
    %v229 = vmul.f32 %v190, %v220
    %v230 = vmul.f32 %v194, %v220
    %v231 = vmul.f32 %v198, %v220
    %v232 = vmul.f32 %v202, %v220
    %v233 = vmul.f32 %v206, %v220
    %v234 = vmul.f32 %v210, %v220
    %v235 = vmul.f32 %v214, %v220
    %v236 = vmul.f32 %v218, %v220
    %v237 = vadd.f32 %v140, %v221
    %v238 = vadd.f32 %v141, %v222
    %v239 = vadd.f32 %v142, %v223
    %v240 = vadd.f32 %v143, %v224
    %v241 = vadd.f32 %v144, %v225
    %v242 = vadd.f32 %v145, %v226
    %v243 = vadd.f32 %v146, %v227
    %v244 = vadd.f32 %v147, %v228
    %v245 = vadd.f32 %v148, %v229
    %v246 = vadd.f32 %v149, %v230
    %v247 = vadd.f32 %v150, %v231
    %v248 = vadd.f32 %v151, %v232
    %v249 = vadd.f32 %v152, %v233
    %v250 = vadd.f32 %v153, %v234
    %v251 = vadd.f32 %v154, %v235
    %v252 = vadd.f32 %v155, %v236
    %253 = vset.pattern.permute.xlu0 2
    %254 = vperm.xlu0 %253, %v43
    %v255 = vpop.permute.xlu0 %254
    %257 = vset.pattern.permute.xlu0 2
    %258 = vperm.xlu0 %257, %v44
    %v259 = vpop.permute.xlu0 %258
    %261 = vset.pattern.permute.xlu0 2
    %262 = vperm.xlu0 %261, %v45
    %v263 = vpop.permute.xlu0 %262
    %265 = vset.pattern.permute.xlu0 2
    %266 = vperm.xlu0 %265, %v46
    %v267 = vpop.permute.xlu0 %266
    %269 = vset.pattern.permute.xlu0 2
    %270 = vperm.xlu0 %269, %v47
    %v271 = vpop.permute.xlu0 %270
    %273 = vset.pattern.permute.xlu0 2
    %274 = vperm.xlu0 %273, %v48
    %v275 = vpop.permute.xlu0 %274
    %277 = vset.pattern.permute.xlu0 2
    %278 = vperm.xlu0 %277, %v49
    %v279 = vpop.permute.xlu0 %278
    %281 = vset.pattern.permute.xlu0 2
    %282 = vperm.xlu0 %281, %v50
    %v283 = vpop.permute.xlu0 %282
    %285 = vset.pattern.permute.xlu0 2
    %286 = vperm.xlu0 %285, %v51
    %v287 = vpop.permute.xlu0 %286
    %289 = vset.pattern.permute.xlu0 2
    %290 = vperm.xlu0 %289, %v52
    %v291 = vpop.permute.xlu0 %290
    %293 = vset.pattern.permute.xlu0 2
    %294 = vperm.xlu0 %293, %v53
    %v295 = vpop.permute.xlu0 %294
    %297 = vset.pattern.permute.xlu0 2
    %298 = vperm.xlu0 %297, %v54
    %v299 = vpop.permute.xlu0 %298
    %301 = vset.pattern.permute.xlu0 2
    %302 = vperm.xlu0 %301, %v55
    %v303 = vpop.permute.xlu0 %302
    %305 = vset.pattern.permute.xlu0 2
    %306 = vperm.xlu0 %305, %v56
    %v307 = vpop.permute.xlu0 %306
    %309 = vset.pattern.permute.xlu0 2
    %310 = vperm.xlu0 %309, %v57
    %v311 = vpop.permute.xlu0 %310
    %313 = vset.pattern.permute.xlu0 2
    %314 = vperm.xlu0 %313, %v58
    %v315 = vpop.permute.xlu0 %314
    %v317 = vadd.f32 %v237, %v255
    %v318 = vadd.f32 %v238, %v259
    %v319 = vadd.f32 %v239, %v263
    %v320 = vadd.f32 %v240, %v267
    %v321 = vadd.f32 %v241, %v271
    %v322 = vadd.f32 %v242, %v275
    %v323 = vadd.f32 %v243, %v279
    %v324 = vadd.f32 %v244, %v283
    %v325 = vadd.f32 %v245, %v287
    %v326 = vadd.f32 %v246, %v291
    %v327 = vadd.f32 %v247, %v295
    %v328 = vadd.f32 %v248, %v299
    %v329 = vadd.f32 %v249, %v303
    %v330 = vadd.f32 %v250, %v307
    %v331 = vadd.f32 %v251, %v311
    %v332 = vadd.f32 %v252, %v315
    %v333 = vmax.f32 %v317, 0.0
    %v334 = vmax.f32 %v318, 0.0
    %v335 = vmax.f32 %v319, 0.0
    %v336 = vmax.f32 %v320, 0.0
    %v337 = vmax.f32 %v321, 0.0
    %v338 = vmax.f32 %v322, 0.0
    %v339 = vmax.f32 %v323, 0.0
    %v340 = vmax.f32 %v324, 0.0
    %v341 = vmax.f32 %v325, 0.0
    %v342 = vmax.f32 %v326, 0.0
    %v343 = vmax.f32 %v327, 0.0
    %v344 = vmax.f32 %v328, 0.0
    %v345 = vmax.f32 %v329, 0.0
    %v346 = vmax.f32 %v330, 0.0
    %v347 = vmax.f32 %v331, 0.0
    %v348 = vmax.f32 %v332, 0.0
    %v349 = vld [vmem:[#allocation5 + $0x8] sm:$0xff]
    %v350 = vld [vmem:[#allocation5 + $0x20] sm:$0xff]
    %v351 = vld [vmem:[#allocation5 + $0x38] sm:$0xff]
    %v352 = vld [vmem:[#allocation5 + $0x50] sm:$0xff]
    %v353 = vld [vmem:[#allocation5 + $0x68] sm:$0xff]
    %v354 = vld [vmem:[#allocation5 + $0x80] sm:$0xff]
    %v355 = vld [vmem:[#allocation5 + $0x98] sm:$0xff]
    %v356 = vld [vmem:[#allocation5 + $0xb0] sm:$0xff]
    %v357 = vld [vmem:[#allocation5 + $0xc8] sm:$0xff]
    %v358 = vld [vmem:[#allocation5 + $0xe0] sm:$0xff]
    %v359 = vld [vmem:[#allocation5 + $0xf8] sm:$0xff]
    %v360 = vld [vmem:[#allocation5 + $0x110] sm:$0xff]
    %v361 = vld [vmem:[#allocation5 + $0x128] sm:$0xff]
    %v362 = vld [vmem:[#allocation5 + $0x140] sm:$0xff]
    %v363 = vld [vmem:[#allocation5 + $0x158] sm:$0xff]
    %v364 = vld [vmem:[#allocation5 + $0x170] sm:$0xff]
    %v365 = vand.u32 %v348, 4294901760
    %366 = vmatpush.msra.mxu0 %v365
    %v367 = vand.u32 %v347, 4294901760
    %368 = vmatpush.msra.mxu0 %v367
    %v369 = vand.u32 %v346, 4294901760
    %370 = vmatpush.msra.mxu0 %v369
    %v371 = vand.u32 %v345, 4294901760
    %372 = vmatpush.msra.mxu0 %v371
    %v373 = vand.u32 %v344, 4294901760
    %374 = vmatpush.msra.mxu0 %v373
    %v375 = vand.u32 %v343, 4294901760
    %376 = vmatpush.msra.mxu0 %v375
    %v377 = vand.u32 %v342, 4294901760
    %378 = vmatpush.msra.mxu0 %v377
    %v379 = vand.u32 %v341, 4294901760
    %380 = vmatpush.msra.mxu0 %v379
    %v381 = vand.u32 %v340, 4294901760
    %382 = vmatpush.msra.mxu0 %v381
    %v383 = vand.u32 %v339, 4294901760
    %384 = vmatpush.msra.mxu0 %v383
    %v385 = vand.u32 %v338, 4294901760
    %386 = vmatpush.msra.mxu0 %v385
    %v387 = vand.u32 %v337, 4294901760
    %388 = vmatpush.msra.mxu0 %v387
    %v389 = vand.u32 %v336, 4294901760
    %390 = vmatpush.msra.mxu0 %v389
    %v391 = vand.u32 %v335, 4294901760
    %392 = vmatpush.msra.mxu0 %v391
    %v393 = vand.u32 %v334, 4294901760
    %394 = vmatpush.msra.mxu0 %v393
    %v395 = vand.u32 %v333, 4294901760
    %396 = vmatpush.msra.mxu0 %v395
    %v397 = vand.u32 %v349, 4294901760
    %v398 = vsub.f32 %v349, %v397
    %v399 = vand.u32 %v398, 4294901760
    %v400 = vsub.f32 %v398, %v399
    %v401 = vand.u32 %v400, 4294901760
    %402 = vmatmul.f32.gmra.mxu0 %v401
    %v403 = vpop.f32.mrf.mxu0
    %v404 = vadd.f32 0.0, %v403
    %v405 = vand.u32 %v350, 4294901760
    %v406 = vsub.f32 %v350, %v405
    %v407 = vand.u32 %v406, 4294901760
    %v408 = vsub.f32 %v406, %v407
    %v409 = vand.u32 %v408, 4294901760
    %410 = vmatmul.f32.gmra.mxu0 %v409
    %v411 = vpop.f32.mrf.mxu0
    %v412 = vadd.f32 0.0, %v411
    %v413 = vand.u32 %v351, 4294901760
    %v414 = vsub.f32 %v351, %v413
    %v415 = vand.u32 %v414, 4294901760
    %v416 = vsub.f32 %v414, %v415
    %v417 = vand.u32 %v416, 4294901760
    %418 = vmatmul.f32.gmra.mxu0 %v417
    %v419 = vpop.f32.mrf.mxu0
    %v420 = vadd.f32 0.0, %v419
    %v421 = vand.u32 %v352, 4294901760
    %v422 = vsub.f32 %v352, %v421
    %v423 = vand.u32 %v422, 4294901760
    %v424 = vsub.f32 %v422, %v423
    %v425 = vand.u32 %v424, 4294901760
    %426 = vmatmul.f32.gmra.mxu0 %v425
    %v427 = vpop.f32.mrf.mxu0
    %v428 = vadd.f32 0.0, %v427
    %v429 = vand.u32 %v353, 4294901760
    %v430 = vsub.f32 %v353, %v429
    %v431 = vand.u32 %v430, 4294901760
    %v432 = vsub.f32 %v430, %v431
    %v433 = vand.u32 %v432, 4294901760
    %434 = vmatmul.f32.gmra.mxu0 %v433
    %v435 = vpop.f32.mrf.mxu0
    %v436 = vadd.f32 0.0, %v435
    %v437 = vand.u32 %v354, 4294901760
    %v438 = vsub.f32 %v354, %v437
    %v439 = vand.u32 %v438, 4294901760
    %v440 = vsub.f32 %v438, %v439
    %v441 = vand.u32 %v440, 4294901760
    %442 = vmatmul.f32.gmra.mxu0 %v441
    %v443 = vpop.f32.mrf.mxu0
    %v444 = vadd.f32 0.0, %v443
    %v445 = vand.u32 %v355, 4294901760
    %v446 = vsub.f32 %v355, %v445
    %v447 = vand.u32 %v446, 4294901760
    %v448 = vsub.f32 %v446, %v447
    %v449 = vand.u32 %v448, 4294901760
    %450 = vmatmul.f32.gmra.mxu0 %v449
    %v451 = vpop.f32.mrf.mxu0
    %v452 = vadd.f32 0.0, %v451
    %v453 = vand.u32 %v356, 4294901760
    %v454 = vsub.f32 %v356, %v453
    %v455 = vand.u32 %v454, 4294901760
    %v456 = vsub.f32 %v454, %v455
    %v457 = vand.u32 %v456, 4294901760
    %458 = vmatmul.f32.gmra.mxu0 %v457
    %v459 = vpop.f32.mrf.mxu0
    %v460 = vadd.f32 0.0, %v459
    %v461 = vand.u32 %v357, 4294901760
    %v462 = vsub.f32 %v357, %v461
    %v463 = vand.u32 %v462, 4294901760
    %v464 = vsub.f32 %v462, %v463
    %v465 = vand.u32 %v464, 4294901760
    %466 = vmatmul.f32.gmra.mxu0 %v465
    %v467 = vpop.f32.mrf.mxu0
    %v468 = vadd.f32 0.0, %v467
    %v469 = vand.u32 %v358, 4294901760
    %v470 = vsub.f32 %v358, %v469
    %v471 = vand.u32 %v470, 4294901760
    %v472 = vsub.f32 %v470, %v471
    %v473 = vand.u32 %v472, 4294901760
    %474 = vmatmul.f32.gmra.mxu0 %v473
    %v475 = vpop.f32.mrf.mxu0
    %v476 = vadd.f32 0.0, %v475
    %v477 = vand.u32 %v359, 4294901760
    %v478 = vsub.f32 %v359, %v477
    %v479 = vand.u32 %v478, 4294901760
    %v480 = vsub.f32 %v478, %v479
    %v481 = vand.u32 %v480, 4294901760
    %482 = vmatmul.f32.gmra.mxu0 %v481
    %v483 = vpop.f32.mrf.mxu0
    %v484 = vadd.f32 0.0, %v483
    %v485 = vand.u32 %v360, 4294901760
    %v486 = vsub.f32 %v360, %v485
    %v487 = vand.u32 %v486, 4294901760
    %v488 = vsub.f32 %v486, %v487
    %v489 = vand.u32 %v488, 4294901760
    %490 = vmatmul.f32.gmra.mxu0 %v489
    %v491 = vpop.f32.mrf.mxu0
    %v492 = vadd.f32 0.0, %v491
    %v493 = vand.u32 %v361, 4294901760
    %v494 = vsub.f32 %v361, %v493
    %v495 = vand.u32 %v494, 4294901760
    %v496 = vsub.f32 %v494, %v495
    %v497 = vand.u32 %v496, 4294901760
    %498 = vmatmul.f32.gmra.mxu0 %v497
    %v499 = vpop.f32.mrf.mxu0
    %v500 = vadd.f32 0.0, %v499
    %v501 = vand.u32 %v362, 4294901760
    %v502 = vsub.f32 %v362, %v501
    %v503 = vand.u32 %v502, 4294901760
    %v504 = vsub.f32 %v502, %v503
    %v505 = vand.u32 %v504, 4294901760
    %506 = vmatmul.f32.gmra.mxu0 %v505
    %v507 = vpop.f32.mrf.mxu0
    %v508 = vadd.f32 0.0, %v507
    %v509 = vand.u32 %v363, 4294901760
    %v510 = vsub.f32 %v363, %v509
    %v511 = vand.u32 %v510, 4294901760
    %v512 = vsub.f32 %v510, %v511
    %v513 = vand.u32 %v512, 4294901760
    %514 = vmatmul.f32.gmra.mxu0 %v513
    %v515 = vpop.f32.mrf.mxu0
    %v516 = vadd.f32 0.0, %v515
    %v517 = vand.u32 %v364, 4294901760
    %v518 = vsub.f32 %v364, %v517
    %v519 = vand.u32 %v518, 4294901760
    %v520 = vsub.f32 %v518, %v519
    %v521 = vand.u32 %v520, 4294901760
    %522 = vmatmul.f32.gmra.mxu0 %v521
    %v523 = vpop.f32.mrf.mxu0
    %v524 = vadd.f32 0.0, %v523
    %525 = vdwg.mxu0
    %v526 = vand.u32 %v348, 4294901760
    %v527 = vsub.f32 %v348, %v526
    %v528 = vand.u32 %v527, 4294901760
    %v529 = vsub.f32 %v527, %v528
    %v530 = vand.u32 %v529, 4294901760
    %531 = vmatpush.msra.mxu0 %v530
    %v532 = vand.u32 %v347, 4294901760
    %v533 = vsub.f32 %v347, %v532
    %v534 = vand.u32 %v533, 4294901760
    %v535 = vsub.f32 %v533, %v534
    %v536 = vand.u32 %v535, 4294901760
    %537 = vmatpush.msra.mxu0 %v536
    %v538 = vand.u32 %v346, 4294901760
    %v539 = vsub.f32 %v346, %v538
    %v540 = vand.u32 %v539, 4294901760
    %v541 = vsub.f32 %v539, %v540
    %v542 = vand.u32 %v541, 4294901760
    %543 = vmatpush.msra.mxu0 %v542
    %v544 = vand.u32 %v345, 4294901760
    %v545 = vsub.f32 %v345, %v544
    %v546 = vand.u32 %v545, 4294901760
    %v547 = vsub.f32 %v545, %v546
    %v548 = vand.u32 %v547, 4294901760
    %549 = vmatpush.msra.mxu0 %v548
    %v550 = vand.u32 %v344, 4294901760
    %v551 = vsub.f32 %v344, %v550
    %v552 = vand.u32 %v551, 4294901760
    %v553 = vsub.f32 %v551, %v552
    %v554 = vand.u32 %v553, 4294901760
    %555 = vmatpush.msra.mxu0 %v554
    %v556 = vand.u32 %v343, 4294901760
    %v557 = vsub.f32 %v343, %v556
    %v558 = vand.u32 %v557, 4294901760
    %v559 = vsub.f32 %v557, %v558
    %v560 = vand.u32 %v559, 4294901760
    %561 = vmatpush.msra.mxu0 %v560
    %v562 = vand.u32 %v342, 4294901760
    %v563 = vsub.f32 %v342, %v562
    %v564 = vand.u32 %v563, 4294901760
    %v565 = vsub.f32 %v563, %v564
    %v566 = vand.u32 %v565, 4294901760
    %567 = vmatpush.msra.mxu0 %v566
    %v568 = vand.u32 %v341, 4294901760
    %v569 = vsub.f32 %v341, %v568
    %v570 = vand.u32 %v569, 4294901760
    %v571 = vsub.f32 %v569, %v570
    %v572 = vand.u32 %v571, 4294901760
    %573 = vmatpush.msra.mxu0 %v572
    %v574 = vand.u32 %v340, 4294901760
    %v575 = vsub.f32 %v340, %v574
    %v576 = vand.u32 %v575, 4294901760
    %v577 = vsub.f32 %v575, %v576
    %v578 = vand.u32 %v577, 4294901760
    %579 = vmatpush.msra.mxu0 %v578
    %v580 = vand.u32 %v339, 4294901760
    %v581 = vsub.f32 %v339, %v580
    %v582 = vand.u32 %v581, 4294901760
    %v583 = vsub.f32 %v581, %v582
    %v584 = vand.u32 %v583, 4294901760
    %585 = vmatpush.msra.mxu0 %v584
    %v586 = vand.u32 %v338, 4294901760
    %v587 = vsub.f32 %v338, %v586
    %v588 = vand.u32 %v587, 4294901760
    %v589 = vsub.f32 %v587, %v588
    %v590 = vand.u32 %v589, 4294901760
    %591 = vmatpush.msra.mxu0 %v590
    %v592 = vand.u32 %v337, 4294901760
    %v593 = vsub.f32 %v337, %v592
    %v594 = vand.u32 %v593, 4294901760
    %v595 = vsub.f32 %v593, %v594
    %v596 = vand.u32 %v595, 4294901760
    %597 = vmatpush.msra.mxu0 %v596
    %v598 = vand.u32 %v336, 4294901760
    %v599 = vsub.f32 %v336, %v598
    %v600 = vand.u32 %v599, 4294901760
    %v601 = vsub.f32 %v599, %v600
    %v602 = vand.u32 %v601, 4294901760
    %603 = vmatpush.msra.mxu0 %v602
    %v604 = vand.u32 %v335, 4294901760
    %v605 = vsub.f32 %v335, %v604
    %v606 = vand.u32 %v605, 4294901760
    %v607 = vsub.f32 %v605, %v606
    %v608 = vand.u32 %v607, 4294901760
    %609 = vmatpush.msra.mxu0 %v608
    %v610 = vand.u32 %v334, 4294901760
    %v611 = vsub.f32 %v334, %v610
    %v612 = vand.u32 %v611, 4294901760
    %v613 = vsub.f32 %v611, %v612
    %v614 = vand.u32 %v613, 4294901760
    %615 = vmatpush.msra.mxu0 %v614
    %v616 = vand.u32 %v333, 4294901760
    %v617 = vsub.f32 %v333, %v616
    %v618 = vand.u32 %v617, 4294901760
    %v619 = vsub.f32 %v617, %v618
    %v620 = vand.u32 %v619, 4294901760
    %621 = vmatpush.msra.mxu0 %v620
    %v622 = vand.u32 %v349, 4294901760
    %623 = vmatmul.f32.gmra.mxu0 %v622
    %v624 = vpop.f32.mrf.mxu0
    %v625 = vadd.f32 %v404, %v624
    %v626 = vand.u32 %v350, 4294901760
    %627 = vmatmul.f32.gmra.mxu0 %v626
    %v628 = vpop.f32.mrf.mxu0
    %v629 = vadd.f32 %v412, %v628
    %v630 = vand.u32 %v351, 4294901760
    %631 = vmatmul.f32.gmra.mxu0 %v630
    %v632 = vpop.f32.mrf.mxu0
    %v633 = vadd.f32 %v420, %v632
    %v634 = vand.u32 %v352, 4294901760
    %635 = vmatmul.f32.gmra.mxu0 %v634
    %v636 = vpop.f32.mrf.mxu0
    %v637 = vadd.f32 %v428, %v636
    %v638 = vand.u32 %v353, 4294901760
    %639 = vmatmul.f32.gmra.mxu0 %v638
    %v640 = vpop.f32.mrf.mxu0
    %v641 = vadd.f32 %v436, %v640
    %v642 = vand.u32 %v354, 4294901760
    %643 = vmatmul.f32.gmra.mxu0 %v642
    %v644 = vpop.f32.mrf.mxu0
    %v645 = vadd.f32 %v444, %v644
    %v646 = vand.u32 %v355, 4294901760
    %647 = vmatmul.f32.gmra.mxu0 %v646
    %v648 = vpop.f32.mrf.mxu0
    %v649 = vadd.f32 %v452, %v648
    %v650 = vand.u32 %v356, 4294901760
    %651 = vmatmul.f32.gmra.mxu0 %v650
    %v652 = vpop.f32.mrf.mxu0
    %v653 = vadd.f32 %v460, %v652
    %v654 = vand.u32 %v357, 4294901760
    %655 = vmatmul.f32.gmra.mxu0 %v654
    %v656 = vpop.f32.mrf.mxu0
    %v657 = vadd.f32 %v468, %v656
    %v658 = vand.u32 %v358, 4294901760
    %659 = vmatmul.f32.gmra.mxu0 %v658
    %v660 = vpop.f32.mrf.mxu0
    %v661 = vadd.f32 %v476, %v660
    %v662 = vand.u32 %v359, 4294901760
    %663 = vmatmul.f32.gmra.mxu0 %v662
    %v664 = vpop.f32.mrf.mxu0
    %v665 = vadd.f32 %v484, %v664
    %v666 = vand.u32 %v360, 4294901760
    %667 = vmatmul.f32.gmra.mxu0 %v666
    %v668 = vpop.f32.mrf.mxu0
    %v669 = vadd.f32 %v492, %v668
    %v670 = vand.u32 %v361, 4294901760
    %671 = vmatmul.f32.gmra.mxu0 %v670
    %v672 = vpop.f32.mrf.mxu0
    %v673 = vadd.f32 %v500, %v672
    %v674 = vand.u32 %v362, 4294901760
    %675 = vmatmul.f32.gmra.mxu0 %v674
    %v676 = vpop.f32.mrf.mxu0
    %v677 = vadd.f32 %v508, %v676
    %v678 = vand.u32 %v363, 4294901760
    %679 = vmatmul.f32.gmra.mxu0 %v678
    %v680 = vpop.f32.mrf.mxu0
    %v681 = vadd.f32 %v516, %v680
    %v682 = vand.u32 %v364, 4294901760
    %683 = vmatmul.f32.gmra.mxu0 %v682
    %v684 = vpop.f32.mrf.mxu0
    %v685 = vadd.f32 %v524, %v684
    %686 = vdwg.mxu0
    %v687 = vand.u32 %v348, 4294901760
    %v688 = vsub.f32 %v348, %v687
    %689 = vmatpush.msra.mxu0 %v688
    %v690 = vand.u32 %v347, 4294901760
    %v691 = vsub.f32 %v347, %v690
    %692 = vmatpush.msra.mxu0 %v691
    %v693 = vand.u32 %v346, 4294901760
    %v694 = vsub.f32 %v346, %v693
    %695 = vmatpush.msra.mxu0 %v694
    %v696 = vand.u32 %v345, 4294901760
    %v697 = vsub.f32 %v345, %v696
    %698 = vmatpush.msra.mxu0 %v697
    %v699 = vand.u32 %v344, 4294901760
    %v700 = vsub.f32 %v344, %v699
    %701 = vmatpush.msra.mxu0 %v700
    %v702 = vand.u32 %v343, 4294901760
    %v703 = vsub.f32 %v343, %v702
    %704 = vmatpush.msra.mxu0 %v703
    %v705 = vand.u32 %v342, 4294901760
    %v706 = vsub.f32 %v342, %v705
    %707 = vmatpush.msra.mxu0 %v706
    %v708 = vand.u32 %v341, 4294901760
    %v709 = vsub.f32 %v341, %v708
    %710 = vmatpush.msra.mxu0 %v709
    %v711 = vand.u32 %v340, 4294901760
    %v712 = vsub.f32 %v340, %v711
    %713 = vmatpush.msra.mxu0 %v712
    %v714 = vand.u32 %v339, 4294901760
    %v715 = vsub.f32 %v339, %v714
    %716 = vmatpush.msra.mxu0 %v715
    %v717 = vand.u32 %v338, 4294901760
    %v718 = vsub.f32 %v338, %v717
    %719 = vmatpush.msra.mxu0 %v718
    %v720 = vand.u32 %v337, 4294901760
    %v721 = vsub.f32 %v337, %v720
    %722 = vmatpush.msra.mxu0 %v721
    %v723 = vand.u32 %v336, 4294901760
    %v724 = vsub.f32 %v336, %v723
    %725 = vmatpush.msra.mxu0 %v724
    %v726 = vand.u32 %v335, 4294901760
    %v727 = vsub.f32 %v335, %v726
    %728 = vmatpush.msra.mxu0 %v727
    %v729 = vand.u32 %v334, 4294901760
    %v730 = vsub.f32 %v334, %v729
    %731 = vmatpush.msra.mxu0 %v730
    %v732 = vand.u32 %v333, 4294901760
    %v733 = vsub.f32 %v333, %v732
    %734 = vmatpush.msra.mxu0 %v733
    %v735 = vand.u32 %v349, 4294901760
    %v736 = vsub.f32 %v349, %v735
    %737 = vmatmul.f32.gmra.mxu0 %v736
    %v738 = vpop.f32.mrf.mxu0
    %v739 = vadd.f32 %v625, %v738
    %v740 = vand.u32 %v350, 4294901760
    %v741 = vsub.f32 %v350, %v740
    %742 = vmatmul.f32.gmra.mxu0 %v741
    %v743 = vpop.f32.mrf.mxu0
    %v744 = vadd.f32 %v629, %v743
    %v745 = vand.u32 %v351, 4294901760
    %v746 = vsub.f32 %v351, %v745
    %747 = vmatmul.f32.gmra.mxu0 %v746
    %v748 = vpop.f32.mrf.mxu0
    %v749 = vadd.f32 %v633, %v748
    %v750 = vand.u32 %v352, 4294901760
    %v751 = vsub.f32 %v352, %v750
    %752 = vmatmul.f32.gmra.mxu0 %v751
    %v753 = vpop.f32.mrf.mxu0
    %v754 = vadd.f32 %v637, %v753
    %v755 = vand.u32 %v353, 4294901760
    %v756 = vsub.f32 %v353, %v755
    %757 = vmatmul.f32.gmra.mxu0 %v756
    %v758 = vpop.f32.mrf.mxu0
    %v759 = vadd.f32 %v641, %v758
    %v760 = vand.u32 %v354, 4294901760
    %v761 = vsub.f32 %v354, %v760
    %762 = vmatmul.f32.gmra.mxu0 %v761
    %v763 = vpop.f32.mrf.mxu0
    %v764 = vadd.f32 %v645, %v763
    %v765 = vand.u32 %v355, 4294901760
    %v766 = vsub.f32 %v355, %v765
    %767 = vmatmul.f32.gmra.mxu0 %v766
    %v768 = vpop.f32.mrf.mxu0
    %v769 = vadd.f32 %v649, %v768
    %v770 = vand.u32 %v356, 4294901760
    %v771 = vsub.f32 %v356, %v770
    %772 = vmatmul.f32.gmra.mxu0 %v771
    %v773 = vpop.f32.mrf.mxu0
    %v774 = vadd.f32 %v653, %v773
    %v775 = vand.u32 %v357, 4294901760
    %v776 = vsub.f32 %v357, %v775
    %777 = vmatmul.f32.gmra.mxu0 %v776
    %v778 = vpop.f32.mrf.mxu0
    %v779 = vadd.f32 %v657, %v778
    %v780 = vand.u32 %v358, 4294901760
    %v781 = vsub.f32 %v358, %v780
    %782 = vmatmul.f32.gmra.mxu0 %v781
    %v783 = vpop.f32.mrf.mxu0
    %v784 = vadd.f32 %v661, %v783
    %v785 = vand.u32 %v359, 4294901760
    %v786 = vsub.f32 %v359, %v785
    %787 = vmatmul.f32.gmra.mxu0 %v786
    %v788 = vpop.f32.mrf.mxu0
    %v789 = vadd.f32 %v665, %v788
    %v790 = vand.u32 %v360, 4294901760
    %v791 = vsub.f32 %v360, %v790
    %792 = vmatmul.f32.gmra.mxu0 %v791
    %v793 = vpop.f32.mrf.mxu0
    %v794 = vadd.f32 %v669, %v793
    %v795 = vand.u32 %v361, 4294901760
    %v796 = vsub.f32 %v361, %v795
    %797 = vmatmul.f32.gmra.mxu0 %v796
    %v798 = vpop.f32.mrf.mxu0
    %v799 = vadd.f32 %v673, %v798
    %v800 = vand.u32 %v362, 4294901760
    %v801 = vsub.f32 %v362, %v800
    %802 = vmatmul.f32.gmra.mxu0 %v801
    %v803 = vpop.f32.mrf.mxu0
    %v804 = vadd.f32 %v677, %v803
    %v805 = vand.u32 %v363, 4294901760
    %v806 = vsub.f32 %v363, %v805
    %807 = vmatmul.f32.gmra.mxu0 %v806
    %v808 = vpop.f32.mrf.mxu0
    %v809 = vadd.f32 %v681, %v808
    %v810 = vand.u32 %v364, 4294901760
    %v811 = vsub.f32 %v364, %v810
    %812 = vmatmul.f32.gmra.mxu0 %v811
    %v813 = vpop.f32.mrf.mxu0
    %v814 = vadd.f32 %v685, %v813
    %815 = vdwg.mxu0
    %v816 = vand.u32 %v348, 4294901760
    %817 = vmatpush.msra.mxu0 %v816
    %v818 = vand.u32 %v347, 4294901760
    %819 = vmatpush.msra.mxu0 %v818
    %v820 = vand.u32 %v346, 4294901760
    %821 = vmatpush.msra.mxu0 %v820
    %v822 = vand.u32 %v345, 4294901760
    %823 = vmatpush.msra.mxu0 %v822
    %v824 = vand.u32 %v344, 4294901760
    %825 = vmatpush.msra.mxu0 %v824
    %v826 = vand.u32 %v343, 4294901760
    %827 = vmatpush.msra.mxu0 %v826
    %v828 = vand.u32 %v342, 4294901760
    %829 = vmatpush.msra.mxu0 %v828
    %v830 = vand.u32 %v341, 4294901760
    %831 = vmatpush.msra.mxu0 %v830
    %v832 = vand.u32 %v340, 4294901760
    %833 = vmatpush.msra.mxu0 %v832
    %v834 = vand.u32 %v339, 4294901760
    %835 = vmatpush.msra.mxu0 %v834
    %v836 = vand.u32 %v338, 4294901760
    %837 = vmatpush.msra.mxu0 %v836
    %v838 = vand.u32 %v337, 4294901760
    %839 = vmatpush.msra.mxu0 %v838
    %v840 = vand.u32 %v336, 4294901760
    %841 = vmatpush.msra.mxu0 %v840
    %v842 = vand.u32 %v335, 4294901760
    %843 = vmatpush.msra.mxu0 %v842
    %v844 = vand.u32 %v334, 4294901760
    %845 = vmatpush.msra.mxu0 %v844
    %v846 = vand.u32 %v333, 4294901760
    %847 = vmatpush.msra.mxu0 %v846
    %v848 = vand.u32 %v349, 4294901760
    %v849 = vsub.f32 %v349, %v848
    %v850 = vand.u32 %v849, 4294901760
    %851 = vmatmul.f32.gmra.mxu0 %v850
    %v852 = vpop.f32.mrf.mxu0
    %v853 = vadd.f32 %v739, %v852
    %v854 = vand.u32 %v350, 4294901760
    %v855 = vsub.f32 %v350, %v854
    %v856 = vand.u32 %v855, 4294901760
    %857 = vmatmul.f32.gmra.mxu0 %v856
    %v858 = vpop.f32.mrf.mxu0
    %v859 = vadd.f32 %v744, %v858
    %v860 = vand.u32 %v351, 4294901760
    %v861 = vsub.f32 %v351, %v860
    %v862 = vand.u32 %v861, 4294901760
    %863 = vmatmul.f32.gmra.mxu0 %v862
    %v864 = vpop.f32.mrf.mxu0
    %v865 = vadd.f32 %v749, %v864
    %v866 = vand.u32 %v352, 4294901760
    %v867 = vsub.f32 %v352, %v866
    %v868 = vand.u32 %v867, 4294901760
    %869 = vmatmul.f32.gmra.mxu0 %v868
    %v870 = vpop.f32.mrf.mxu0
    %v871 = vadd.f32 %v754, %v870
    %v872 = vand.u32 %v353, 4294901760
    %v873 = vsub.f32 %v353, %v872
    %v874 = vand.u32 %v873, 4294901760
    %875 = vmatmul.f32.gmra.mxu0 %v874
    %v876 = vpop.f32.mrf.mxu0
    %v877 = vadd.f32 %v759, %v876
    %v878 = vand.u32 %v354, 4294901760
    %v879 = vsub.f32 %v354, %v878
    %v880 = vand.u32 %v879, 4294901760
    %881 = vmatmul.f32.gmra.mxu0 %v880
    %v882 = vpop.f32.mrf.mxu0
    %v883 = vadd.f32 %v764, %v882
    %v884 = vand.u32 %v355, 4294901760
    %v885 = vsub.f32 %v355, %v884
    %v886 = vand.u32 %v885, 4294901760
    %887 = vmatmul.f32.gmra.mxu0 %v886
    %v888 = vpop.f32.mrf.mxu0
    %v889 = vadd.f32 %v769, %v888
    %v890 = vand.u32 %v356, 4294901760
    %v891 = vsub.f32 %v356, %v890
    %v892 = vand.u32 %v891, 4294901760
    %893 = vmatmul.f32.gmra.mxu0 %v892
    %v894 = vpop.f32.mrf.mxu0
    %v895 = vadd.f32 %v774, %v894
    %v896 = vand.u32 %v357, 4294901760
    %v897 = vsub.f32 %v357, %v896
    %v898 = vand.u32 %v897, 4294901760
    %899 = vmatmul.f32.gmra.mxu0 %v898
    %v900 = vpop.f32.mrf.mxu0
    %v901 = vadd.f32 %v779, %v900
    %v902 = vand.u32 %v358, 4294901760
    %v903 = vsub.f32 %v358, %v902
    %v904 = vand.u32 %v903, 4294901760
    %905 = vmatmul.f32.gmra.mxu0 %v904
    %v906 = vpop.f32.mrf.mxu0
    %v907 = vadd.f32 %v784, %v906
    %v908 = vand.u32 %v359, 4294901760
    %v909 = vsub.f32 %v359, %v908
    %v910 = vand.u32 %v909, 4294901760
    %911 = vmatmul.f32.gmra.mxu0 %v910
    %v912 = vpop.f32.mrf.mxu0
    %v913 = vadd.f32 %v789, %v912
    %v914 = vand.u32 %v360, 4294901760
    %v915 = vsub.f32 %v360, %v914
    %v916 = vand.u32 %v915, 4294901760
    %917 = vmatmul.f32.gmra.mxu0 %v916
    %v918 = vpop.f32.mrf.mxu0
    %v919 = vadd.f32 %v794, %v918
    %v920 = vand.u32 %v361, 4294901760
    %v921 = vsub.f32 %v361, %v920
    %v922 = vand.u32 %v921, 4294901760
    %923 = vmatmul.f32.gmra.mxu0 %v922
    %v924 = vpop.f32.mrf.mxu0
    %v925 = vadd.f32 %v799, %v924
    %v926 = vand.u32 %v362, 4294901760
    %v927 = vsub.f32 %v362, %v926
    %v928 = vand.u32 %v927, 4294901760
    %929 = vmatmul.f32.gmra.mxu0 %v928
    %v930 = vpop.f32.mrf.mxu0
    %v931 = vadd.f32 %v804, %v930
    %v932 = vand.u32 %v363, 4294901760
    %v933 = vsub.f32 %v363, %v932
    %v934 = vand.u32 %v933, 4294901760
    %935 = vmatmul.f32.gmra.mxu0 %v934
    %v936 = vpop.f32.mrf.mxu0
    %v937 = vadd.f32 %v809, %v936
    %v938 = vand.u32 %v364, 4294901760
    %v939 = vsub.f32 %v364, %v938
    %v940 = vand.u32 %v939, 4294901760
    %941 = vmatmul.f32.gmra.mxu0 %v940
    %v942 = vpop.f32.mrf.mxu0
    %v943 = vadd.f32 %v814, %v942
    %944 = vdwg.mxu0
    %v945 = vand.u32 %v348, 4294901760
    %v946 = vsub.f32 %v348, %v945
    %v947 = vand.u32 %v946, 4294901760
    %948 = vmatpush.msra.mxu0 %v947
    %v949 = vand.u32 %v347, 4294901760
    %v950 = vsub.f32 %v347, %v949
    %v951 = vand.u32 %v950, 4294901760
    %952 = vmatpush.msra.mxu0 %v951
    %v953 = vand.u32 %v346, 4294901760
    %v954 = vsub.f32 %v346, %v953
    %v955 = vand.u32 %v954, 4294901760
    %956 = vmatpush.msra.mxu0 %v955
    %v957 = vand.u32 %v345, 4294901760
    %v958 = vsub.f32 %v345, %v957
    %v959 = vand.u32 %v958, 4294901760
    %960 = vmatpush.msra.mxu0 %v959
    %v961 = vand.u32 %v344, 4294901760
    %v962 = vsub.f32 %v344, %v961
    %v963 = vand.u32 %v962, 4294901760
    %964 = vmatpush.msra.mxu0 %v963
    %v965 = vand.u32 %v343, 4294901760
    %v966 = vsub.f32 %v343, %v965
    %v967 = vand.u32 %v966, 4294901760
    %968 = vmatpush.msra.mxu0 %v967
    %v969 = vand.u32 %v342, 4294901760
    %v970 = vsub.f32 %v342, %v969
    %v971 = vand.u32 %v970, 4294901760
    %972 = vmatpush.msra.mxu0 %v971
    %v973 = vand.u32 %v341, 4294901760
    %v974 = vsub.f32 %v341, %v973
    %v975 = vand.u32 %v974, 4294901760
    %976 = vmatpush.msra.mxu0 %v975
    %v977 = vand.u32 %v340, 4294901760
    %v978 = vsub.f32 %v340, %v977
    %v979 = vand.u32 %v978, 4294901760
    %980 = vmatpush.msra.mxu0 %v979
    %v981 = vand.u32 %v339, 4294901760
    %v982 = vsub.f32 %v339, %v981
    %v983 = vand.u32 %v982, 4294901760
    %984 = vmatpush.msra.mxu0 %v983
    %v985 = vand.u32 %v338, 4294901760
    %v986 = vsub.f32 %v338, %v985
    %v987 = vand.u32 %v986, 4294901760
    %988 = vmatpush.msra.mxu0 %v987
    %v989 = vand.u32 %v337, 4294901760
    %v990 = vsub.f32 %v337, %v989
    %v991 = vand.u32 %v990, 4294901760
    %992 = vmatpush.msra.mxu0 %v991
    %v993 = vand.u32 %v336, 4294901760
    %v994 = vsub.f32 %v336, %v993
    %v995 = vand.u32 %v994, 4294901760
    %996 = vmatpush.msra.mxu0 %v995
    %v997 = vand.u32 %v335, 4294901760
    %v998 = vsub.f32 %v335, %v997
    %v999 = vand.u32 %v998, 4294901760
    %1000 = vmatpush.msra.mxu0 %v999
    %v1001 = vand.u32 %v334, 4294901760
    %v1002 = vsub.f32 %v334, %v1001
    %v1003 = vand.u32 %v1002, 4294901760
    %1004 = vmatpush.msra.mxu0 %v1003
    %v1005 = vand.u32 %v333, 4294901760
    %v1006 = vsub.f32 %v333, %v1005
    %v1007 = vand.u32 %v1006, 4294901760
    %1008 = vmatpush.msra.mxu0 %v1007
    %v1009 = vand.u32 %v349, 4294901760
    %1010 = vmatmul.f32.gmra.mxu0 %v1009
    %v1011 = vpop.f32.mrf.mxu0
    %v1012 = vadd.f32 %v853, %v1011
    %v1013 = vand.u32 %v350, 4294901760
    %1014 = vmatmul.f32.gmra.mxu0 %v1013
    %v1015 = vpop.f32.mrf.mxu0
    %v1016 = vadd.f32 %v859, %v1015
    %v1017 = vand.u32 %v351, 4294901760
    %1018 = vmatmul.f32.gmra.mxu0 %v1017
    %v1019 = vpop.f32.mrf.mxu0
    %v1020 = vadd.f32 %v865, %v1019
    %v1021 = vand.u32 %v352, 4294901760
    %1022 = vmatmul.f32.gmra.mxu0 %v1021
    %v1023 = vpop.f32.mrf.mxu0
    %v1024 = vadd.f32 %v871, %v1023
    %v1025 = vand.u32 %v353, 4294901760
    %1026 = vmatmul.f32.gmra.mxu0 %v1025
    %v1027 = vpop.f32.mrf.mxu0
    %v1028 = vadd.f32 %v877, %v1027
    %v1029 = vand.u32 %v354, 4294901760
    %1030 = vmatmul.f32.gmra.mxu0 %v1029
    %v1031 = vpop.f32.mrf.mxu0
    %v1032 = vadd.f32 %v883, %v1031
    %v1033 = vand.u32 %v355, 4294901760
    %1034 = vmatmul.f32.gmra.mxu0 %v1033
    %v1035 = vpop.f32.mrf.mxu0
    %v1036 = vadd.f32 %v889, %v1035
    %v1037 = vand.u32 %v356, 4294901760
    %1038 = vmatmul.f32.gmra.mxu0 %v1037
    %v1039 = vpop.f32.mrf.mxu0
    %v1040 = vadd.f32 %v895, %v1039
    %v1041 = vand.u32 %v357, 4294901760
    %1042 = vmatmul.f32.gmra.mxu0 %v1041
    %v1043 = vpop.f32.mrf.mxu0
    %v1044 = vadd.f32 %v901, %v1043
    %v1045 = vand.u32 %v358, 4294901760
    %1046 = vmatmul.f32.gmra.mxu0 %v1045
    %v1047 = vpop.f32.mrf.mxu0
    %v1048 = vadd.f32 %v907, %v1047
    %v1049 = vand.u32 %v359, 4294901760
    %1050 = vmatmul.f32.gmra.mxu0 %v1049
    %v1051 = vpop.f32.mrf.mxu0
    %v1052 = vadd.f32 %v913, %v1051
    %v1053 = vand.u32 %v360, 4294901760
    %1054 = vmatmul.f32.gmra.mxu0 %v1053
    %v1055 = vpop.f32.mrf.mxu0
    %v1056 = vadd.f32 %v919, %v1055
    %v1057 = vand.u32 %v361, 4294901760
    %1058 = vmatmul.f32.gmra.mxu0 %v1057
    %v1059 = vpop.f32.mrf.mxu0
    %v1060 = vadd.f32 %v925, %v1059
    %v1061 = vand.u32 %v362, 4294901760
    %1062 = vmatmul.f32.gmra.mxu0 %v1061
    %v1063 = vpop.f32.mrf.mxu0
    %v1064 = vadd.f32 %v931, %v1063
    %v1065 = vand.u32 %v363, 4294901760
    %1066 = vmatmul.f32.gmra.mxu0 %v1065
    %v1067 = vpop.f32.mrf.mxu0
    %v1068 = vadd.f32 %v937, %v1067
    %v1069 = vand.u32 %v364, 4294901760
    %1070 = vmatmul.f32.gmra.mxu0 %v1069
    %v1071 = vpop.f32.mrf.mxu0
    %v1072 = vadd.f32 %v943, %v1071
    %1073 = vdwg.mxu0
    %v1074 = vand.u32 %v348, 4294901760
    %1075 = vmatpush.msra.mxu0 %v1074
    %v1076 = vand.u32 %v347, 4294901760
    %1077 = vmatpush.msra.mxu0 %v1076
    %v1078 = vand.u32 %v346, 4294901760
    %1079 = vmatpush.msra.mxu0 %v1078
    %v1080 = vand.u32 %v345, 4294901760
    %1081 = vmatpush.msra.mxu0 %v1080
    %v1082 = vand.u32 %v344, 4294901760
    %1083 = vmatpush.msra.mxu0 %v1082
    %v1084 = vand.u32 %v343, 4294901760
    %1085 = vmatpush.msra.mxu0 %v1084
    %v1086 = vand.u32 %v342, 4294901760
    %1087 = vmatpush.msra.mxu0 %v1086
    %v1088 = vand.u32 %v341, 4294901760
    %1089 = vmatpush.msra.mxu0 %v1088
    %v1090 = vand.u32 %v340, 4294901760
    %1091 = vmatpush.msra.mxu0 %v1090
    %v1092 = vand.u32 %v339, 4294901760
    %1093 = vmatpush.msra.mxu0 %v1092
    %v1094 = vand.u32 %v338, 4294901760
    %1095 = vmatpush.msra.mxu0 %v1094
    %v1096 = vand.u32 %v337, 4294901760
    %1097 = vmatpush.msra.mxu0 %v1096
    %v1098 = vand.u32 %v336, 4294901760
    %1099 = vmatpush.msra.mxu0 %v1098
    %v1100 = vand.u32 %v335, 4294901760
    %1101 = vmatpush.msra.mxu0 %v1100
    %v1102 = vand.u32 %v334, 4294901760
    %1103 = vmatpush.msra.mxu0 %v1102
    %v1104 = vand.u32 %v333, 4294901760
    %1105 = vmatpush.msra.mxu0 %v1104
    %v1106 = vand.u32 %v349, 4294901760
    %1107 = vmatmul.f32.gmra.mxu0 %v1106
    %v1108 = vpop.f32.mrf.mxu0
    %v1109 = vadd.f32 %v1012, %v1108
    %v1110 = vand.u32 %v350, 4294901760
    %1111 = vmatmul.f32.gmra.mxu0 %v1110
    %v1112 = vpop.f32.mrf.mxu0
    %v1113 = vadd.f32 %v1016, %v1112
    %v1114 = vand.u32 %v351, 4294901760
    %1115 = vmatmul.f32.gmra.mxu0 %v1114
    %v1116 = vpop.f32.mrf.mxu0
    %v1117 = vadd.f32 %v1020, %v1116
    %v1118 = vand.u32 %v352, 4294901760
    %1119 = vmatmul.f32.gmra.mxu0 %v1118
    %v1120 = vpop.f32.mrf.mxu0
    %v1121 = vadd.f32 %v1024, %v1120
    %v1122 = vand.u32 %v353, 4294901760
    %1123 = vmatmul.f32.gmra.mxu0 %v1122
    %v1124 = vpop.f32.mrf.mxu0
    %v1125 = vadd.f32 %v1028, %v1124
    %v1126 = vand.u32 %v354, 4294901760
    %1127 = vmatmul.f32.gmra.mxu0 %v1126
    %v1128 = vpop.f32.mrf.mxu0
    %v1129 = vadd.f32 %v1032, %v1128
    %v1130 = vand.u32 %v355, 4294901760
    %1131 = vmatmul.f32.gmra.mxu0 %v1130
    %v1132 = vpop.f32.mrf.mxu0
    %v1133 = vadd.f32 %v1036, %v1132
    %v1134 = vand.u32 %v356, 4294901760
    %1135 = vmatmul.f32.gmra.mxu0 %v1134
    %v1136 = vpop.f32.mrf.mxu0
    %v1137 = vadd.f32 %v1040, %v1136
    %v1138 = vand.u32 %v357, 4294901760
    %1139 = vmatmul.f32.gmra.mxu0 %v1138
    %v1140 = vpop.f32.mrf.mxu0
    %v1141 = vadd.f32 %v1044, %v1140
    %v1142 = vand.u32 %v358, 4294901760
    %1143 = vmatmul.f32.gmra.mxu0 %v1142
    %v1144 = vpop.f32.mrf.mxu0
    %v1145 = vadd.f32 %v1048, %v1144
    %v1146 = vand.u32 %v359, 4294901760
    %1147 = vmatmul.f32.gmra.mxu0 %v1146
    %v1148 = vpop.f32.mrf.mxu0
    %v1149 = vadd.f32 %v1052, %v1148
    %v1150 = vand.u32 %v360, 4294901760
    %1151 = vmatmul.f32.gmra.mxu0 %v1150
    %v1152 = vpop.f32.mrf.mxu0
    %v1153 = vadd.f32 %v1056, %v1152
    %v1154 = vand.u32 %v361, 4294901760
    %1155 = vmatmul.f32.gmra.mxu0 %v1154
    %v1156 = vpop.f32.mrf.mxu0
    %v1157 = vadd.f32 %v1060, %v1156
    %v1158 = vand.u32 %v362, 4294901760
    %1159 = vmatmul.f32.gmra.mxu0 %v1158
    %v1160 = vpop.f32.mrf.mxu0
    %v1161 = vadd.f32 %v1064, %v1160
    %v1162 = vand.u32 %v363, 4294901760
    %1163 = vmatmul.f32.gmra.mxu0 %v1162
    %v1164 = vpop.f32.mrf.mxu0
    %v1165 = vadd.f32 %v1068, %v1164
    %v1166 = vand.u32 %v364, 4294901760
    %1167 = vmatmul.f32.gmra.mxu0 %v1166
    %v1168 = vpop.f32.mrf.mxu0
    %v1169 = vadd.f32 %v1072, %v1168
    %1170 = vdwg.mxu0
    %v1171 = vmax.f32 %v1109, 0.0
    %v1172 = vmax.f32 %v1113, 0.0
    %v1173 = vmax.f32 %v1117, 0.0
    %v1174 = vmax.f32 %v1121, 0.0
    %v1175 = vmax.f32 %v1125, 0.0
    %v1176 = vmax.f32 %v1129, 0.0
    %v1177 = vmax.f32 %v1133, 0.0
    %v1178 = vmax.f32 %v1137, 0.0
    %v1179 = vmax.f32 %v1141, 0.0
    %v1180 = vmax.f32 %v1145, 0.0
    %v1181 = vmax.f32 %v1149, 0.0
    %v1182 = vmax.f32 %v1153, 0.0
    %v1183 = vmax.f32 %v1157, 0.0
    %v1184 = vmax.f32 %v1161, 0.0
    %v1185 = vmax.f32 %v1165, 0.0
    %v1186 = vmax.f32 %v1169, 0.0
    %v1187 = vld [vmem:[#allocation5 + $0x10] sm:$0xff]
    %v1188 = vld [vmem:[#allocation5 + $0x28] sm:$0xff]
    %v1189 = vld [vmem:[#allocation5 + $0x40] sm:$0xff]
    %v1190 = vld [vmem:[#allocation5 + $0x58] sm:$0xff]
    %v1191 = vld [vmem:[#allocation5 + $0x70] sm:$0xff]
    %v1192 = vld [vmem:[#allocation5 + $0x88] sm:$0xff]
    %v1193 = vld [vmem:[#allocation5 + $0xa0] sm:$0xff]
    %v1194 = vld [vmem:[#allocation5 + $0xb8] sm:$0xff]
    %v1195 = vld [vmem:[#allocation5 + $0xd0] sm:$0xff]
    %v1196 = vld [vmem:[#allocation5 + $0xe8] sm:$0xff]
    %v1197 = vld [vmem:[#allocation5 + $0x100] sm:$0xff]
    %v1198 = vld [vmem:[#allocation5 + $0x118] sm:$0xff]
    %v1199 = vld [vmem:[#allocation5 + $0x130] sm:$0xff]
    %v1200 = vld [vmem:[#allocation5 + $0x148] sm:$0xff]
    %v1201 = vld [vmem:[#allocation5 + $0x160] sm:$0xff]
    %v1202 = vld [vmem:[#allocation5 + $0x178] sm:$0xff]
    %v1203 = vand.u32 %v1186, 4294901760
    %1204 = vmatpush.msra.mxu0 %v1203
    %v1205 = vand.u32 %v1185, 4294901760
    %1206 = vmatpush.msra.mxu0 %v1205
    %v1207 = vand.u32 %v1184, 4294901760
    %1208 = vmatpush.msra.mxu0 %v1207
    %v1209 = vand.u32 %v1183, 4294901760
    %1210 = vmatpush.msra.mxu0 %v1209
    %v1211 = vand.u32 %v1182, 4294901760
    %1212 = vmatpush.msra.mxu0 %v1211
    %v1213 = vand.u32 %v1181, 4294901760
    %1214 = vmatpush.msra.mxu0 %v1213
    %v1215 = vand.u32 %v1180, 4294901760
    %1216 = vmatpush.msra.mxu0 %v1215
    %v1217 = vand.u32 %v1179, 4294901760
    %1218 = vmatpush.msra.mxu0 %v1217
    %v1219 = vand.u32 %v1178, 4294901760
    %1220 = vmatpush.msra.mxu0 %v1219
    %v1221 = vand.u32 %v1177, 4294901760
    %1222 = vmatpush.msra.mxu0 %v1221
    %v1223 = vand.u32 %v1176, 4294901760
    %1224 = vmatpush.msra.mxu0 %v1223
    %v1225 = vand.u32 %v1175, 4294901760
    %1226 = vmatpush.msra.mxu0 %v1225
    %v1227 = vand.u32 %v1174, 4294901760
    %1228 = vmatpush.msra.mxu0 %v1227
    %v1229 = vand.u32 %v1173, 4294901760
    %1230 = vmatpush.msra.mxu0 %v1229
    %v1231 = vand.u32 %v1172, 4294901760
    %1232 = vmatpush.msra.mxu0 %v1231
    %v1233 = vand.u32 %v1171, 4294901760
    %1234 = vmatpush.msra.mxu0 %v1233
    %v1235 = vand.u32 %v1187, 4294901760
    %v1236 = vsub.f32 %v1187, %v1235
    %v1237 = vand.u32 %v1236, 4294901760
    %v1238 = vsub.f32 %v1236, %v1237
    %v1239 = vand.u32 %v1238, 4294901760
    %1240 = vmatmul.f32.gmra.mxu0 %v1239
    %v1241 = vpop.f32.mrf.mxu0
    %v1242 = vadd.f32 0.0, %v1241
    %v1243 = vand.u32 %v1188, 4294901760
    %v1244 = vsub.f32 %v1188, %v1243
    %v1245 = vand.u32 %v1244, 4294901760
    %v1246 = vsub.f32 %v1244, %v1245
    %v1247 = vand.u32 %v1246, 4294901760
    %1248 = vmatmul.f32.gmra.mxu0 %v1247
    %v1249 = vpop.f32.mrf.mxu0
    %v1250 = vand.u32 %v1189, 4294901760
    %v1251 = vsub.f32 %v1189, %v1250
    %v1252 = vand.u32 %v1251, 4294901760
    %v1253 = vsub.f32 %v1251, %v1252
    %v1254 = vand.u32 %v1253, 4294901760
    %1255 = vmatmul.f32.gmra.mxu0 %v1254
    %v1256 = vpop.f32.mrf.mxu0
    %v1257 = vand.u32 %v1190, 4294901760
    %v1258 = vsub.f32 %v1190, %v1257
    %v1259 = vand.u32 %v1258, 4294901760
    %v1260 = vsub.f32 %v1258, %v1259
    %v1261 = vand.u32 %v1260, 4294901760
    %1262 = vmatmul.f32.gmra.mxu0 %v1261
    %v1263 = vpop.f32.mrf.mxu0
    %v1264 = vand.u32 %v1191, 4294901760
    %v1265 = vsub.f32 %v1191, %v1264
    %v1266 = vand.u32 %v1265, 4294901760
    %v1267 = vsub.f32 %v1265, %v1266
    %v1268 = vand.u32 %v1267, 4294901760
    %1269 = vmatmul.f32.gmra.mxu0 %v1268
    %v1270 = vpop.f32.mrf.mxu0
    %v1271 = vand.u32 %v1192, 4294901760
    %v1272 = vsub.f32 %v1192, %v1271
    %v1273 = vand.u32 %v1272, 4294901760
    %v1274 = vsub.f32 %v1272, %v1273
    %v1275 = vand.u32 %v1274, 4294901760
    %1276 = vmatmul.f32.gmra.mxu0 %v1275
    %v1277 = vpop.f32.mrf.mxu0
    %v1278 = vand.u32 %v1193, 4294901760
    %v1279 = vsub.f32 %v1193, %v1278
    %v1280 = vand.u32 %v1279, 4294901760
    %v1281 = vsub.f32 %v1279, %v1280
    %v1282 = vand.u32 %v1281, 4294901760
    %1283 = vmatmul.f32.gmra.mxu0 %v1282
    %v1284 = vpop.f32.mrf.mxu0
    %v1285 = vand.u32 %v1194, 4294901760
    %v1286 = vsub.f32 %v1194, %v1285
    %v1287 = vand.u32 %v1286, 4294901760
    %v1288 = vsub.f32 %v1286, %v1287
    %v1289 = vand.u32 %v1288, 4294901760
    %1290 = vmatmul.f32.gmra.mxu0 %v1289
    %v1291 = vpop.f32.mrf.mxu0
    %v1292 = vand.u32 %v1195, 4294901760
    %v1293 = vsub.f32 %v1195, %v1292
    %v1294 = vand.u32 %v1293, 4294901760
    %v1295 = vsub.f32 %v1293, %v1294
    %v1296 = vand.u32 %v1295, 4294901760
    %1297 = vmatmul.f32.gmra.mxu0 %v1296
    %v1298 = vpop.f32.mrf.mxu0
    %v1299 = vand.u32 %v1196, 4294901760
    %v1300 = vsub.f32 %v1196, %v1299
    %v1301 = vand.u32 %v1300, 4294901760
    %v1302 = vsub.f32 %v1300, %v1301
    %v1303 = vand.u32 %v1302, 4294901760
    %1304 = vmatmul.f32.gmra.mxu0 %v1303
    %v1305 = vpop.f32.mrf.mxu0
    %v1306 = vand.u32 %v1197, 4294901760
    %v1307 = vsub.f32 %v1197, %v1306
    %v1308 = vand.u32 %v1307, 4294901760
    %v1309 = vsub.f32 %v1307, %v1308
    %v1310 = vand.u32 %v1309, 4294901760
    %1311 = vmatmul.f32.gmra.mxu0 %v1310
    %v1312 = vpop.f32.mrf.mxu0
    %v1313 = vand.u32 %v1198, 4294901760
    %v1314 = vsub.f32 %v1198, %v1313
    %v1315 = vand.u32 %v1314, 4294901760
    %v1316 = vsub.f32 %v1314, %v1315
    %v1317 = vand.u32 %v1316, 4294901760
    %1318 = vmatmul.f32.gmra.mxu0 %v1317
    %v1319 = vpop.f32.mrf.mxu0
    %v1320 = vand.u32 %v1199, 4294901760
    %v1321 = vsub.f32 %v1199, %v1320
    %v1322 = vand.u32 %v1321, 4294901760
    %v1323 = vsub.f32 %v1321, %v1322
    %v1324 = vand.u32 %v1323, 4294901760
    %1325 = vmatmul.f32.gmra.mxu0 %v1324
    %v1326 = vpop.f32.mrf.mxu0
    %v1327 = vand.u32 %v1200, 4294901760
    %v1328 = vsub.f32 %v1200, %v1327
    %v1329 = vand.u32 %v1328, 4294901760
    %v1330 = vsub.f32 %v1328, %v1329
    %v1331 = vand.u32 %v1330, 4294901760
    %1332 = vmatmul.f32.gmra.mxu0 %v1331
    %v1333 = vpop.f32.mrf.mxu0
    %v1334 = vand.u32 %v1201, 4294901760
    %v1335 = vsub.f32 %v1201, %v1334
    %v1336 = vand.u32 %v1335, 4294901760
    %v1337 = vsub.f32 %v1335, %v1336
    %v1338 = vand.u32 %v1337, 4294901760
    %1339 = vmatmul.f32.gmra.mxu0 %v1338
    %v1340 = vpop.f32.mrf.mxu0
    %v1341 = vand.u32 %v1202, 4294901760
    %v1342 = vsub.f32 %v1202, %v1341
    %v1343 = vand.u32 %v1342, 4294901760
    %v1344 = vsub.f32 %v1342, %v1343
    %v1345 = vand.u32 %v1344, 4294901760
    %1346 = vmatmul.f32.gmra.mxu0 %v1345
    %v1347 = vpop.f32.mrf.mxu0
    %1348 = vdwg.mxu0
    %v1349 = vand.u32 %v1186, 4294901760
    %v1350 = vsub.f32 %v1186, %v1349
    %v1351 = vand.u32 %v1350, 4294901760
    %v1352 = vsub.f32 %v1350, %v1351
    %v1353 = vand.u32 %v1352, 4294901760
    %1354 = vmatpush.msra.mxu0 %v1353
    %v1355 = vand.u32 %v1185, 4294901760
    %v1356 = vsub.f32 %v1185, %v1355
    %v1357 = vand.u32 %v1356, 4294901760
    %v1358 = vsub.f32 %v1356, %v1357
    %v1359 = vand.u32 %v1358, 4294901760
    %1360 = vmatpush.msra.mxu0 %v1359
    %v1361 = vand.u32 %v1184, 4294901760
    %v1362 = vsub.f32 %v1184, %v1361
    %v1363 = vand.u32 %v1362, 4294901760
    %v1364 = vsub.f32 %v1362, %v1363
    %v1365 = vand.u32 %v1364, 4294901760
    %1366 = vmatpush.msra.mxu0 %v1365
    %v1367 = vand.u32 %v1183, 4294901760
    %v1368 = vsub.f32 %v1183, %v1367
    %v1369 = vand.u32 %v1368, 4294901760
    %v1370 = vsub.f32 %v1368, %v1369
    %v1371 = vand.u32 %v1370, 4294901760
    %1372 = vmatpush.msra.mxu0 %v1371
    %v1373 = vand.u32 %v1182, 4294901760
    %v1374 = vsub.f32 %v1182, %v1373
    %v1375 = vand.u32 %v1374, 4294901760
    %v1376 = vsub.f32 %v1374, %v1375
    %v1377 = vand.u32 %v1376, 4294901760
    %1378 = vmatpush.msra.mxu0 %v1377
    %v1379 = vand.u32 %v1181, 4294901760
    %v1380 = vsub.f32 %v1181, %v1379
    %v1381 = vand.u32 %v1380, 4294901760
    %v1382 = vsub.f32 %v1380, %v1381
    %v1383 = vand.u32 %v1382, 4294901760
    %1384 = vmatpush.msra.mxu0 %v1383
    %v1385 = vand.u32 %v1180, 4294901760
    %v1386 = vsub.f32 %v1180, %v1385
    %v1387 = vand.u32 %v1386, 4294901760
    %v1388 = vsub.f32 %v1386, %v1387
    %v1389 = vand.u32 %v1388, 4294901760
    %1390 = vmatpush.msra.mxu0 %v1389
    %v1391 = vand.u32 %v1179, 4294901760
    %v1392 = vsub.f32 %v1179, %v1391
    %v1393 = vand.u32 %v1392, 4294901760
    %v1394 = vsub.f32 %v1392, %v1393
    %v1395 = vand.u32 %v1394, 4294901760
    %1396 = vmatpush.msra.mxu0 %v1395
    %v1397 = vand.u32 %v1178, 4294901760
    %v1398 = vsub.f32 %v1178, %v1397
    %v1399 = vand.u32 %v1398, 4294901760
    %v1400 = vsub.f32 %v1398, %v1399
    %v1401 = vand.u32 %v1400, 4294901760
    %1402 = vmatpush.msra.mxu0 %v1401
    %v1403 = vand.u32 %v1177, 4294901760
    %v1404 = vsub.f32 %v1177, %v1403
    %v1405 = vand.u32 %v1404, 4294901760
    %v1406 = vsub.f32 %v1404, %v1405
    %v1407 = vand.u32 %v1406, 4294901760
    %1408 = vmatpush.msra.mxu0 %v1407
    %v1409 = vand.u32 %v1176, 4294901760
    %v1410 = vsub.f32 %v1176, %v1409
    %v1411 = vand.u32 %v1410, 4294901760
    %v1412 = vsub.f32 %v1410, %v1411
    %v1413 = vand.u32 %v1412, 4294901760
    %1414 = vmatpush.msra.mxu0 %v1413
    %v1415 = vand.u32 %v1175, 4294901760
    %v1416 = vsub.f32 %v1175, %v1415
    %v1417 = vand.u32 %v1416, 4294901760
    %v1418 = vsub.f32 %v1416, %v1417
    %v1419 = vand.u32 %v1418, 4294901760
    %1420 = vmatpush.msra.mxu0 %v1419
    %v1421 = vand.u32 %v1174, 4294901760
    %v1422 = vsub.f32 %v1174, %v1421
    %v1423 = vand.u32 %v1422, 4294901760
    %v1424 = vsub.f32 %v1422, %v1423
    %v1425 = vand.u32 %v1424, 4294901760
    %1426 = vmatpush.msra.mxu0 %v1425
    %v1427 = vand.u32 %v1173, 4294901760
    %v1428 = vsub.f32 %v1173, %v1427
    %v1429 = vand.u32 %v1428, 4294901760
    %v1430 = vsub.f32 %v1428, %v1429
    %v1431 = vand.u32 %v1430, 4294901760
    %1432 = vmatpush.msra.mxu0 %v1431
    %v1433 = vand.u32 %v1172, 4294901760
    %v1434 = vsub.f32 %v1172, %v1433
    %v1435 = vand.u32 %v1434, 4294901760
    %v1436 = vsub.f32 %v1434, %v1435
    %v1437 = vand.u32 %v1436, 4294901760
    %1438 = vmatpush.msra.mxu0 %v1437
    %v1439 = vand.u32 %v1171, 4294901760
    %v1440 = vsub.f32 %v1171, %v1439
    %v1441 = vand.u32 %v1440, 4294901760
    %v1442 = vsub.f32 %v1440, %v1441
    %v1443 = vand.u32 %v1442, 4294901760
    %1444 = vmatpush.msra.mxu0 %v1443
    %v1445 = vand.u32 %v1187, 4294901760
    %1446 = vmatmul.f32.gmra.mxu0 %v1445
    %v1447 = vpop.f32.mrf.mxu0
    %v1448 = vadd.f32 %v1242, %v1447
    %v1449 = vand.u32 %v1188, 4294901760
    %1450 = vmatmul.f32.gmra.mxu0 %v1449
    %v1451 = vpop.f32.mrf.mxu0
    %v1452 = vand.u32 %v1189, 4294901760
    %1453 = vmatmul.f32.gmra.mxu0 %v1452
    %v1454 = vpop.f32.mrf.mxu0
    %v1455 = vand.u32 %v1190, 4294901760
    %1456 = vmatmul.f32.gmra.mxu0 %v1455
    %v1457 = vpop.f32.mrf.mxu0
    %v1458 = vand.u32 %v1191, 4294901760
    %1459 = vmatmul.f32.gmra.mxu0 %v1458
    %v1460 = vpop.f32.mrf.mxu0
    %v1461 = vand.u32 %v1192, 4294901760
    %1462 = vmatmul.f32.gmra.mxu0 %v1461
    %v1463 = vpop.f32.mrf.mxu0
    %v1464 = vand.u32 %v1193, 4294901760
    %1465 = vmatmul.f32.gmra.mxu0 %v1464
    %v1466 = vpop.f32.mrf.mxu0
    %v1467 = vand.u32 %v1194, 4294901760
    %1468 = vmatmul.f32.gmra.mxu0 %v1467
    %v1469 = vpop.f32.mrf.mxu0
    %v1470 = vand.u32 %v1195, 4294901760
    %1471 = vmatmul.f32.gmra.mxu0 %v1470
    %v1472 = vpop.f32.mrf.mxu0
    %v1473 = vand.u32 %v1196, 4294901760
    %1474 = vmatmul.f32.gmra.mxu0 %v1473
    %v1475 = vpop.f32.mrf.mxu0
    %v1476 = vand.u32 %v1197, 4294901760
    %1477 = vmatmul.f32.gmra.mxu0 %v1476
    %v1478 = vpop.f32.mrf.mxu0
    %v1479 = vand.u32 %v1198, 4294901760
    %1480 = vmatmul.f32.gmra.mxu0 %v1479
    %v1481 = vpop.f32.mrf.mxu0
    %v1482 = vand.u32 %v1199, 4294901760
    %1483 = vmatmul.f32.gmra.mxu0 %v1482
    %v1484 = vpop.f32.mrf.mxu0
    %v1485 = vand.u32 %v1200, 4294901760
    %1486 = vmatmul.f32.gmra.mxu0 %v1485
    %v1487 = vpop.f32.mrf.mxu0
    %v1488 = vand.u32 %v1201, 4294901760
    %1489 = vmatmul.f32.gmra.mxu0 %v1488
    %v1490 = vpop.f32.mrf.mxu0
    %v1491 = vand.u32 %v1202, 4294901760
    %1492 = vmatmul.f32.gmra.mxu0 %v1491
    %v1493 = vpop.f32.mrf.mxu0
    %1494 = vdwg.mxu0
    %v1495 = vand.u32 %v1186, 4294901760
    %v1496 = vsub.f32 %v1186, %v1495
    %1497 = vmatpush.msra.mxu0 %v1496
    %v1498 = vand.u32 %v1185, 4294901760
    %v1499 = vsub.f32 %v1185, %v1498
    %1500 = vmatpush.msra.mxu0 %v1499
    %v1501 = vand.u32 %v1184, 4294901760
    %v1502 = vsub.f32 %v1184, %v1501
    %1503 = vmatpush.msra.mxu0 %v1502
    %v1504 = vand.u32 %v1183, 4294901760
    %v1505 = vsub.f32 %v1183, %v1504
    %1506 = vmatpush.msra.mxu0 %v1505
    %v1507 = vand.u32 %v1182, 4294901760
    %v1508 = vsub.f32 %v1182, %v1507
    %1509 = vmatpush.msra.mxu0 %v1508
    %v1510 = vand.u32 %v1181, 4294901760
    %v1511 = vsub.f32 %v1181, %v1510
    %1512 = vmatpush.msra.mxu0 %v1511
    %v1513 = vand.u32 %v1180, 4294901760
    %v1514 = vsub.f32 %v1180, %v1513
    %1515 = vmatpush.msra.mxu0 %v1514
    %v1516 = vand.u32 %v1179, 4294901760
    %v1517 = vsub.f32 %v1179, %v1516
    %1518 = vmatpush.msra.mxu0 %v1517
    %v1519 = vand.u32 %v1178, 4294901760
    %v1520 = vsub.f32 %v1178, %v1519
    %1521 = vmatpush.msra.mxu0 %v1520
    %v1522 = vand.u32 %v1177, 4294901760
    %v1523 = vsub.f32 %v1177, %v1522
    %1524 = vmatpush.msra.mxu0 %v1523
    %v1525 = vand.u32 %v1176, 4294901760
    %v1526 = vsub.f32 %v1176, %v1525
    %1527 = vmatpush.msra.mxu0 %v1526
    %v1528 = vand.u32 %v1175, 4294901760
    %v1529 = vsub.f32 %v1175, %v1528
    %1530 = vmatpush.msra.mxu0 %v1529
    %v1531 = vand.u32 %v1174, 4294901760
    %v1532 = vsub.f32 %v1174, %v1531
    %1533 = vmatpush.msra.mxu0 %v1532
    %v1534 = vand.u32 %v1173, 4294901760
    %v1535 = vsub.f32 %v1173, %v1534
    %1536 = vmatpush.msra.mxu0 %v1535
    %v1537 = vand.u32 %v1172, 4294901760
    %v1538 = vsub.f32 %v1172, %v1537
    %1539 = vmatpush.msra.mxu0 %v1538
    %v1540 = vand.u32 %v1171, 4294901760
    %v1541 = vsub.f32 %v1171, %v1540
    %1542 = vmatpush.msra.mxu0 %v1541
    %v1543 = vand.u32 %v1187, 4294901760
    %v1544 = vsub.f32 %v1187, %v1543
    %1545 = vmatmul.f32.gmra.mxu0 %v1544
    %v1546 = vpop.f32.mrf.mxu0
    %v1547 = vadd.f32 %v1448, %v1546
    %v1548 = vand.u32 %v1188, 4294901760
    %v1549 = vsub.f32 %v1188, %v1548
    %1550 = vmatmul.f32.gmra.mxu0 %v1549
    %v1551 = vpop.f32.mrf.mxu0
    %v1552 = vand.u32 %v1189, 4294901760
    %v1553 = vsub.f32 %v1189, %v1552
    %1554 = vmatmul.f32.gmra.mxu0 %v1553
    %v1555 = vpop.f32.mrf.mxu0
    %v1556 = vand.u32 %v1190, 4294901760
    %v1557 = vsub.f32 %v1190, %v1556
    %1558 = vmatmul.f32.gmra.mxu0 %v1557
    %v1559 = vpop.f32.mrf.mxu0
    %v1560 = vand.u32 %v1191, 4294901760
    %v1561 = vsub.f32 %v1191, %v1560
    %1562 = vmatmul.f32.gmra.mxu0 %v1561
    %v1563 = vpop.f32.mrf.mxu0
    %v1564 = vand.u32 %v1192, 4294901760
    %v1565 = vsub.f32 %v1192, %v1564
    %1566 = vmatmul.f32.gmra.mxu0 %v1565
    %v1567 = vpop.f32.mrf.mxu0
    %v1568 = vand.u32 %v1193, 4294901760
    %v1569 = vsub.f32 %v1193, %v1568
    %1570 = vmatmul.f32.gmra.mxu0 %v1569
    %v1571 = vpop.f32.mrf.mxu0
    %v1572 = vand.u32 %v1194, 4294901760
    %v1573 = vsub.f32 %v1194, %v1572
    %1574 = vmatmul.f32.gmra.mxu0 %v1573
    %v1575 = vpop.f32.mrf.mxu0
    %v1576 = vand.u32 %v1195, 4294901760
    %v1577 = vsub.f32 %v1195, %v1576
    %1578 = vmatmul.f32.gmra.mxu0 %v1577
    %v1579 = vpop.f32.mrf.mxu0
    %v1580 = vand.u32 %v1196, 4294901760
    %v1581 = vsub.f32 %v1196, %v1580
    %1582 = vmatmul.f32.gmra.mxu0 %v1581
    %v1583 = vpop.f32.mrf.mxu0
    %v1584 = vand.u32 %v1197, 4294901760
    %v1585 = vsub.f32 %v1197, %v1584
    %1586 = vmatmul.f32.gmra.mxu0 %v1585
    %v1587 = vpop.f32.mrf.mxu0
    %v1588 = vand.u32 %v1198, 4294901760
    %v1589 = vsub.f32 %v1198, %v1588
    %1590 = vmatmul.f32.gmra.mxu0 %v1589
    %v1591 = vpop.f32.mrf.mxu0
    %v1592 = vand.u32 %v1199, 4294901760
    %v1593 = vsub.f32 %v1199, %v1592
    %1594 = vmatmul.f32.gmra.mxu0 %v1593
    %v1595 = vpop.f32.mrf.mxu0
    %v1596 = vand.u32 %v1200, 4294901760
    %v1597 = vsub.f32 %v1200, %v1596
    %1598 = vmatmul.f32.gmra.mxu0 %v1597
    %v1599 = vpop.f32.mrf.mxu0
    %v1600 = vand.u32 %v1201, 4294901760
    %v1601 = vsub.f32 %v1201, %v1600
    %1602 = vmatmul.f32.gmra.mxu0 %v1601
    %v1603 = vpop.f32.mrf.mxu0
    %v1604 = vand.u32 %v1202, 4294901760
    %v1605 = vsub.f32 %v1202, %v1604
    %1606 = vmatmul.f32.gmra.mxu0 %v1605
    %v1607 = vpop.f32.mrf.mxu0
    %1608 = vdwg.mxu0
    %v1609 = vand.u32 %v1186, 4294901760
    %1610 = vmatpush.msra.mxu0 %v1609
    %v1611 = vand.u32 %v1185, 4294901760
    %1612 = vmatpush.msra.mxu0 %v1611
    %v1613 = vand.u32 %v1184, 4294901760
    %1614 = vmatpush.msra.mxu0 %v1613
    %v1615 = vand.u32 %v1183, 4294901760
    %1616 = vmatpush.msra.mxu0 %v1615
    %v1617 = vand.u32 %v1182, 4294901760
    %1618 = vmatpush.msra.mxu0 %v1617
    %v1619 = vand.u32 %v1181, 4294901760
    %1620 = vmatpush.msra.mxu0 %v1619
    %v1621 = vand.u32 %v1180, 4294901760
    %1622 = vmatpush.msra.mxu0 %v1621
    %v1623 = vand.u32 %v1179, 4294901760
    %1624 = vmatpush.msra.mxu0 %v1623
    %v1625 = vand.u32 %v1178, 4294901760
    %1626 = vmatpush.msra.mxu0 %v1625
    %v1627 = vand.u32 %v1177, 4294901760
    %1628 = vmatpush.msra.mxu0 %v1627
    %v1629 = vand.u32 %v1176, 4294901760
    %1630 = vmatpush.msra.mxu0 %v1629
    %v1631 = vand.u32 %v1175, 4294901760
    %1632 = vmatpush.msra.mxu0 %v1631
    %v1633 = vand.u32 %v1174, 4294901760
    %1634 = vmatpush.msra.mxu0 %v1633
    %v1635 = vand.u32 %v1173, 4294901760
    %1636 = vmatpush.msra.mxu0 %v1635
    %v1637 = vand.u32 %v1172, 4294901760
    %1638 = vmatpush.msra.mxu0 %v1637
    %v1639 = vand.u32 %v1171, 4294901760
    %1640 = vmatpush.msra.mxu0 %v1639
    %v1641 = vand.u32 %v1187, 4294901760
    %v1642 = vsub.f32 %v1187, %v1641
    %v1643 = vand.u32 %v1642, 4294901760
    %1644 = vmatmul.f32.gmra.mxu0 %v1643
    %v1645 = vpop.f32.mrf.mxu0
    %v1646 = vadd.f32 %v1547, %v1645
    %v1647 = vand.u32 %v1188, 4294901760
    %v1648 = vsub.f32 %v1188, %v1647
    %v1649 = vand.u32 %v1648, 4294901760
    %1650 = vmatmul.f32.gmra.mxu0 %v1649
    %v1651 = vpop.f32.mrf.mxu0
    %v1652 = vand.u32 %v1189, 4294901760
    %v1653 = vsub.f32 %v1189, %v1652
    %v1654 = vand.u32 %v1653, 4294901760
    %1655 = vmatmul.f32.gmra.mxu0 %v1654
    %v1656 = vpop.f32.mrf.mxu0
    %v1657 = vand.u32 %v1190, 4294901760
    %v1658 = vsub.f32 %v1190, %v1657
    %v1659 = vand.u32 %v1658, 4294901760
    %1660 = vmatmul.f32.gmra.mxu0 %v1659
    %v1661 = vpop.f32.mrf.mxu0
    %v1662 = vand.u32 %v1191, 4294901760
    %v1663 = vsub.f32 %v1191, %v1662
    %v1664 = vand.u32 %v1663, 4294901760
    %1665 = vmatmul.f32.gmra.mxu0 %v1664
    %v1666 = vpop.f32.mrf.mxu0
    %v1667 = vand.u32 %v1192, 4294901760
    %v1668 = vsub.f32 %v1192, %v1667
    %v1669 = vand.u32 %v1668, 4294901760
    %1670 = vmatmul.f32.gmra.mxu0 %v1669
    %v1671 = vpop.f32.mrf.mxu0
    %v1672 = vand.u32 %v1193, 4294901760
    %v1673 = vsub.f32 %v1193, %v1672
    %v1674 = vand.u32 %v1673, 4294901760
    %1675 = vmatmul.f32.gmra.mxu0 %v1674
    %v1676 = vpop.f32.mrf.mxu0
    %v1677 = vand.u32 %v1194, 4294901760
    %v1678 = vsub.f32 %v1194, %v1677
    %v1679 = vand.u32 %v1678, 4294901760
    %1680 = vmatmul.f32.gmra.mxu0 %v1679
    %v1681 = vpop.f32.mrf.mxu0
    %v1682 = vand.u32 %v1195, 4294901760
    %v1683 = vsub.f32 %v1195, %v1682
    %v1684 = vand.u32 %v1683, 4294901760
    %1685 = vmatmul.f32.gmra.mxu0 %v1684
    %v1686 = vpop.f32.mrf.mxu0
    %v1687 = vand.u32 %v1196, 4294901760
    %v1688 = vsub.f32 %v1196, %v1687
    %v1689 = vand.u32 %v1688, 4294901760
    %1690 = vmatmul.f32.gmra.mxu0 %v1689
    %v1691 = vpop.f32.mrf.mxu0
    %v1692 = vand.u32 %v1197, 4294901760
    %v1693 = vsub.f32 %v1197, %v1692
    %v1694 = vand.u32 %v1693, 4294901760
    %1695 = vmatmul.f32.gmra.mxu0 %v1694
    %v1696 = vpop.f32.mrf.mxu0
    %v1697 = vand.u32 %v1198, 4294901760
    %v1698 = vsub.f32 %v1198, %v1697
    %v1699 = vand.u32 %v1698, 4294901760
    %1700 = vmatmul.f32.gmra.mxu0 %v1699
    %v1701 = vpop.f32.mrf.mxu0
    %v1702 = vand.u32 %v1199, 4294901760
    %v1703 = vsub.f32 %v1199, %v1702
    %v1704 = vand.u32 %v1703, 4294901760
    %1705 = vmatmul.f32.gmra.mxu0 %v1704
    %v1706 = vpop.f32.mrf.mxu0
    %v1707 = vand.u32 %v1200, 4294901760
    %v1708 = vsub.f32 %v1200, %v1707
    %v1709 = vand.u32 %v1708, 4294901760
    %1710 = vmatmul.f32.gmra.mxu0 %v1709
    %v1711 = vpop.f32.mrf.mxu0
    %v1712 = vand.u32 %v1201, 4294901760
    %v1713 = vsub.f32 %v1201, %v1712
    %v1714 = vand.u32 %v1713, 4294901760
    %1715 = vmatmul.f32.gmra.mxu0 %v1714
    %v1716 = vpop.f32.mrf.mxu0
    %v1717 = vand.u32 %v1202, 4294901760
    %v1718 = vsub.f32 %v1202, %v1717
    %v1719 = vand.u32 %v1718, 4294901760
    %1720 = vmatmul.f32.gmra.mxu0 %v1719
    %v1721 = vpop.f32.mrf.mxu0
    %1722 = vdwg.mxu0
    %v1723 = vand.u32 %v1186, 4294901760
    %v1724 = vsub.f32 %v1186, %v1723
    %v1725 = vand.u32 %v1724, 4294901760
    %1726 = vmatpush.msra.mxu0 %v1725
    %v1727 = vand.u32 %v1185, 4294901760
    %v1728 = vsub.f32 %v1185, %v1727
    %v1729 = vand.u32 %v1728, 4294901760
    %1730 = vmatpush.msra.mxu0 %v1729
    %v1731 = vand.u32 %v1184, 4294901760
    %v1732 = vsub.f32 %v1184, %v1731
    %v1733 = vand.u32 %v1732, 4294901760
    %1734 = vmatpush.msra.mxu0 %v1733
    %v1735 = vand.u32 %v1183, 4294901760
    %v1736 = vsub.f32 %v1183, %v1735
    %v1737 = vand.u32 %v1736, 4294901760
    %1738 = vmatpush.msra.mxu0 %v1737
    %v1739 = vand.u32 %v1182, 4294901760
    %v1740 = vsub.f32 %v1182, %v1739
    %v1741 = vand.u32 %v1740, 4294901760
    %1742 = vmatpush.msra.mxu0 %v1741
    %v1743 = vand.u32 %v1181, 4294901760
    %v1744 = vsub.f32 %v1181, %v1743
    %v1745 = vand.u32 %v1744, 4294901760
    %1746 = vmatpush.msra.mxu0 %v1745
    %v1747 = vand.u32 %v1180, 4294901760
    %v1748 = vsub.f32 %v1180, %v1747
    %v1749 = vand.u32 %v1748, 4294901760
    %1750 = vmatpush.msra.mxu0 %v1749
    %v1751 = vand.u32 %v1179, 4294901760
    %v1752 = vsub.f32 %v1179, %v1751
    %v1753 = vand.u32 %v1752, 4294901760
    %1754 = vmatpush.msra.mxu0 %v1753
    %v1755 = vand.u32 %v1178, 4294901760
    %v1756 = vsub.f32 %v1178, %v1755
    %v1757 = vand.u32 %v1756, 4294901760
    %1758 = vmatpush.msra.mxu0 %v1757
    %v1759 = vand.u32 %v1177, 4294901760
    %v1760 = vsub.f32 %v1177, %v1759
    %v1761 = vand.u32 %v1760, 4294901760
    %1762 = vmatpush.msra.mxu0 %v1761
    %v1763 = vand.u32 %v1176, 4294901760
    %v1764 = vsub.f32 %v1176, %v1763
    %v1765 = vand.u32 %v1764, 4294901760
    %1766 = vmatpush.msra.mxu0 %v1765
    %v1767 = vand.u32 %v1175, 4294901760
    %v1768 = vsub.f32 %v1175, %v1767
    %v1769 = vand.u32 %v1768, 4294901760
    %1770 = vmatpush.msra.mxu0 %v1769
    %v1771 = vand.u32 %v1174, 4294901760
    %v1772 = vsub.f32 %v1174, %v1771
    %v1773 = vand.u32 %v1772, 4294901760
    %1774 = vmatpush.msra.mxu0 %v1773
    %v1775 = vand.u32 %v1173, 4294901760
    %v1776 = vsub.f32 %v1173, %v1775
    %v1777 = vand.u32 %v1776, 4294901760
    %1778 = vmatpush.msra.mxu0 %v1777
    %v1779 = vand.u32 %v1172, 4294901760
    %v1780 = vsub.f32 %v1172, %v1779
    %v1781 = vand.u32 %v1780, 4294901760
    %1782 = vmatpush.msra.mxu0 %v1781
    %v1783 = vand.u32 %v1171, 4294901760
    %v1784 = vsub.f32 %v1171, %v1783
    %v1785 = vand.u32 %v1784, 4294901760
    %1786 = vmatpush.msra.mxu0 %v1785
    %v1787 = vand.u32 %v1187, 4294901760
    %1788 = vmatmul.f32.gmra.mxu0 %v1787
    %v1789 = vpop.f32.mrf.mxu0
    %v1790 = vadd.f32 %v1646, %v1789
    %v1791 = vand.u32 %v1188, 4294901760
    %1792 = vmatmul.f32.gmra.mxu0 %v1791
    %v1793 = vpop.f32.mrf.mxu0
    %v1794 = vand.u32 %v1189, 4294901760
    %1795 = vmatmul.f32.gmra.mxu0 %v1794
    %v1796 = vpop.f32.mrf.mxu0
    %v1797 = vand.u32 %v1190, 4294901760
    %1798 = vmatmul.f32.gmra.mxu0 %v1797
    %v1799 = vpop.f32.mrf.mxu0
    %v1800 = vand.u32 %v1191, 4294901760
    %1801 = vmatmul.f32.gmra.mxu0 %v1800
    %v1802 = vpop.f32.mrf.mxu0
    %v1803 = vand.u32 %v1192, 4294901760
    %1804 = vmatmul.f32.gmra.mxu0 %v1803
    %v1805 = vpop.f32.mrf.mxu0
    %v1806 = vand.u32 %v1193, 4294901760
    %1807 = vmatmul.f32.gmra.mxu0 %v1806
    %v1808 = vpop.f32.mrf.mxu0
    %v1809 = vand.u32 %v1194, 4294901760
    %1810 = vmatmul.f32.gmra.mxu0 %v1809
    %v1811 = vpop.f32.mrf.mxu0
    %v1812 = vand.u32 %v1195, 4294901760
    %1813 = vmatmul.f32.gmra.mxu0 %v1812
    %v1814 = vpop.f32.mrf.mxu0
    %v1815 = vand.u32 %v1196, 4294901760
    %1816 = vmatmul.f32.gmra.mxu0 %v1815
    %v1817 = vpop.f32.mrf.mxu0
    %v1818 = vand.u32 %v1197, 4294901760
    %1819 = vmatmul.f32.gmra.mxu0 %v1818
    %v1820 = vpop.f32.mrf.mxu0
    %v1821 = vand.u32 %v1198, 4294901760
    %1822 = vmatmul.f32.gmra.mxu0 %v1821
    %v1823 = vpop.f32.mrf.mxu0
    %v1824 = vand.u32 %v1199, 4294901760
    %1825 = vmatmul.f32.gmra.mxu0 %v1824
    %v1826 = vpop.f32.mrf.mxu0
    %v1827 = vand.u32 %v1200, 4294901760
    %1828 = vmatmul.f32.gmra.mxu0 %v1827
    %v1829 = vpop.f32.mrf.mxu0
    %v1830 = vand.u32 %v1201, 4294901760
    %1831 = vmatmul.f32.gmra.mxu0 %v1830
    %v1832 = vpop.f32.mrf.mxu0
    %v1833 = vand.u32 %v1202, 4294901760
    %1834 = vmatmul.f32.gmra.mxu0 %v1833
    %v1835 = vpop.f32.mrf.mxu0
    %1836 = vdwg.mxu0
    %v1837 = vand.u32 %v1186, 4294901760
    %1838 = vmatpush.msra.mxu0 %v1837
    %v1839 = vand.u32 %v1185, 4294901760
    %1840 = vmatpush.msra.mxu0 %v1839
    %v1841 = vand.u32 %v1184, 4294901760
    %1842 = vmatpush.msra.mxu0 %v1841
    %v1843 = vand.u32 %v1183, 4294901760
    %1844 = vmatpush.msra.mxu0 %v1843
    %v1845 = vand.u32 %v1182, 4294901760
    %1846 = vmatpush.msra.mxu0 %v1845
    %v1847 = vand.u32 %v1181, 4294901760
    %1848 = vmatpush.msra.mxu0 %v1847
    %v1849 = vand.u32 %v1180, 4294901760
    %1850 = vmatpush.msra.mxu0 %v1849
    %v1851 = vand.u32 %v1179, 4294901760
    %1852 = vmatpush.msra.mxu0 %v1851
    %v1853 = vand.u32 %v1178, 4294901760
    %1854 = vmatpush.msra.mxu0 %v1853
    %v1855 = vand.u32 %v1177, 4294901760
    %1856 = vmatpush.msra.mxu0 %v1855
    %v1857 = vand.u32 %v1176, 4294901760
    %1858 = vmatpush.msra.mxu0 %v1857
    %v1859 = vand.u32 %v1175, 4294901760
    %1860 = vmatpush.msra.mxu0 %v1859
    %v1861 = vand.u32 %v1174, 4294901760
    %1862 = vmatpush.msra.mxu0 %v1861
    %v1863 = vand.u32 %v1173, 4294901760
    %1864 = vmatpush.msra.mxu0 %v1863
    %v1865 = vand.u32 %v1172, 4294901760
    %1866 = vmatpush.msra.mxu0 %v1865
    %v1867 = vand.u32 %v1171, 4294901760
    %1868 = vmatpush.msra.mxu0 %v1867
    %v1869 = vand.u32 %v1187, 4294901760
    %1870 = vmatmul.f32.gmra.mxu0 %v1869
    %v1871 = vpop.f32.mrf.mxu0
    %v1872 = vadd.f32 %v1790, %v1871
    %v1873 = vand.u32 %v1188, 4294901760
    %1874 = vmatmul.f32.gmra.mxu0 %v1873
    %v1875 = vpop.f32.mrf.mxu0
    %v1876 = vand.u32 %v1189, 4294901760
    %1877 = vmatmul.f32.gmra.mxu0 %v1876
    %v1878 = vpop.f32.mrf.mxu0
    %v1879 = vand.u32 %v1190, 4294901760
    %1880 = vmatmul.f32.gmra.mxu0 %v1879
    %v1881 = vpop.f32.mrf.mxu0
    %v1882 = vand.u32 %v1191, 4294901760
    %1883 = vmatmul.f32.gmra.mxu0 %v1882
    %v1884 = vpop.f32.mrf.mxu0
    %v1885 = vand.u32 %v1192, 4294901760
    %1886 = vmatmul.f32.gmra.mxu0 %v1885
    %v1887 = vpop.f32.mrf.mxu0
    %v1888 = vand.u32 %v1193, 4294901760
    %1889 = vmatmul.f32.gmra.mxu0 %v1888
    %v1890 = vpop.f32.mrf.mxu0
    %v1891 = vand.u32 %v1194, 4294901760
    %1892 = vmatmul.f32.gmra.mxu0 %v1891
    %v1893 = vpop.f32.mrf.mxu0
    %v1894 = vand.u32 %v1195, 4294901760
    %1895 = vmatmul.f32.gmra.mxu0 %v1894
    %v1896 = vpop.f32.mrf.mxu0
    %v1897 = vand.u32 %v1196, 4294901760
    %1898 = vmatmul.f32.gmra.mxu0 %v1897
    %v1899 = vpop.f32.mrf.mxu0
    %v1900 = vand.u32 %v1197, 4294901760
    %1901 = vmatmul.f32.gmra.mxu0 %v1900
    %v1902 = vpop.f32.mrf.mxu0
    %v1903 = vand.u32 %v1198, 4294901760
    %1904 = vmatmul.f32.gmra.mxu0 %v1903
    %v1905 = vpop.f32.mrf.mxu0
    %v1906 = vand.u32 %v1199, 4294901760
    %1907 = vmatmul.f32.gmra.mxu0 %v1906
    %v1908 = vpop.f32.mrf.mxu0
    %v1909 = vand.u32 %v1200, 4294901760
    %1910 = vmatmul.f32.gmra.mxu0 %v1909
    %v1911 = vpop.f32.mrf.mxu0
    %v1912 = vand.u32 %v1201, 4294901760
    %1913 = vmatmul.f32.gmra.mxu0 %v1912
    %v1914 = vpop.f32.mrf.mxu0
    %v1915 = vand.u32 %v1202, 4294901760
    %1916 = vmatmul.f32.gmra.mxu0 %v1915
    %v1917 = vpop.f32.mrf.mxu0
    %1918 = vdwg.mxu0
    %1919 = vst [vmem:[#allocation7] sm:$0xff] %v1872
    // Predicated region
    $region18: #{tpu_custom_call.1} parent=1 // pred_check
      _
    $region19: #{tpu_custom_call.1} parent=1 // pred_check_branch
      %1921 = sbr.rel (0) target = $region21
    $region20: #{tpu_custom_call.1} parent=1 // pred_region
      %1923 = vsyncadd [#allocation4], 0
      %s1925 = sshll.u32 [#allocation7], 4
      %s1926 = int_to_ptr.vmem [resolvable:$true] %s1925
      %s1927 = sshll.u32 %s2, 4
      %s1928 = int_to_ptr.hbm [resolvable:$true] %s1927
      %1930 = dma.vmem_to_hbm [thread:$0]  %s1926, 128, %s1928, [#allocation4]
    $region21: #{tpu_custom_call.1} parent=1 // pred_fallthru
      _
    // Predicated region
    $region22: #{tpu_custom_call.1} parent=1 // pred_check
      _
    $region23: #{tpu_custom_call.1} parent=1 // pred_check_branch
      %1932 = sbr.rel (0) target = $region25
    $region24: #{tpu_custom_call.1} parent=1 // pred_region
      %1934 = dma.done [#allocation4], 128
    $region25: #{tpu_custom_call.1} parent=1 // pred_fallthru
      _
    %1935 = vsyncpa [#allocation3], 1
    %1936 = vsyncpa [#allocation6], 1
    %1937 = vsyncpa [#allocation4], 1

</llo_original>
